<compile_context>
chip_gen: v6e
topology: v6e:2x2x1
jax: 0.10.0
libtpu: 0.0.40
codegen_flags: <defaults>
</compile_context>

<pallas_src>
import functools

import jax
import jax.numpy as jnp
from jax import lax
from jax.experimental import pallas as pl
from jax.experimental.pallas import tpu as pltpu


def _graph_constructor_kernel(idx_ref,               # SMEM (N,) int32 (scalar prefetch)
                              emb1_hbm, emb2_hbm,    # ANY  (nodes, D) full embedding tables
                              w1_ref, b1_ref,        # VMEM (D, D) torch (out,in) layout, (1, D)
                              w2_ref, b2_ref,        # VMEM (D, D), (1, D)
                              rand_ref,              # VMEM (N, N) uniform noise
                              adj_ref,               # out  VMEM (N, N)
                              e1_buf, e2_buf, sem,   # scratch: VMEM (N, D) x2, DMA sems (2,)
                              *, alpha: float, k: int, n_rows: int):
    f32 = jnp.float32

    # ---- fused embedding gather:  e*_buf[i, :] = emb*[idx[i], :]  ------------
    # Issue all row DMAs first, then drain.  All copies on one semaphore are
    # the same size, and every destination row gets a matching wait before any
    # read of the buffers, so ordering is safe.
    for i in range(n_rows):
        pltpu.make_async_copy(emb1_hbm.at[pl.ds(idx_ref[i], 1)],
                              e1_buf.at[pl.ds(i, 1)], sem.at[0]).start()
        pltpu.make_async_copy(emb2_hbm.at[pl.ds(idx_ref[i], 1)],
                              e2_buf.at[pl.ds(i, 1)], sem.at[1]).start()
    for i in range(n_rows):
        pltpu.make_async_copy(emb1_hbm.at[pl.ds(0, 1)],
                              e1_buf.at[pl.ds(i, 1)], sem.at[0]).wait()
        pltpu.make_async_copy(emb2_hbm.at[pl.ds(0, 1)],
                              e2_buf.at[pl.ds(i, 1)], sem.at[1]).wait()

    # ---- node_vec = tanh(alpha * (x @ W^T + b)) -------------------------------
    # Contract the feature axis of x with the *input* axis (dim 1) of the torch
    # (out, in) weight directly — no transposed weight copy needed.
    dn_feat = (((1,), (1,)), ((), ()))
    nv1 = jnp.tanh(alpha * (lax.dot_general(e1_buf[...], w1_ref[...], dn_feat,
                                            preferred_element_type=f32)
                            + b1_ref[...]))
    nv2 = jnp.tanh(alpha * (lax.dot_general(e2_buf[...], w2_ref[...], dn_feat,
                                            preferred_element_type=f32)
                            + b2_ref[...]))

    # ---- anti-symmetric score: one MXU matmul, then M - M^T -------------------
    # nv1 @ nv2^T - nv2 @ nv1^T == M - M^T with M = nv1 · nv2^T (contract D).
    m = lax.dot_general(nv1, nv2, dn_feat, preferred_element_type=f32)
    a = m - m.T
    adj = jnp.maximum(jnp.tanh(alpha * a), 0.0)

    # ---- per-row top-k mask, emulating torch (adj + rand*0.01).topk(k, 1) -----
    # then mask.scatter_(1, t1, 1).  The noise makes row values unique, so a
    # threshold at the k-th largest value selects (almost surely) exactly k.
    perturbed = adj + rand_ref[...] * 0.01
    work = perturbed
    kth = None
    for _ in range(k):                       # k is small & static -> unrolled
        kth = jnp.max(work, axis=1, keepdims=True)
        work = jnp.where(work >= kth, -jnp.inf, work)
    mask = (perturbed >= kth).astype(adj.dtype)

    adj_ref[...] = adj * mask


def graph_constructor_forward(idx, emb1, emb2, w1, b1, w2, b2, rand_nn,
                              *, alpha: float, k: int):
    """idx: (N,) int node ids; emb*: (nodes, D) embedding tables;
    w*: (D, D) torch-layout (out, in) Linear weights; b*: (D,);
    rand_nn: (N, N) uniform [0,1) noise.  Returns the (N, N) adjacency."""
    nodes, D = emb1.shape
    N = int(idx.shape[0])
    assert k < N, "top-k must select strictly fewer than N neighbours"
    f32 = jnp.float32

    kernel = functools.partial(_graph_constructor_kernel,
                               alpha=float(alpha), k=int(k), n_rows=N)

    grid_spec = pltpu.PrefetchScalarGridSpec(
        num_scalar_prefetch=1,                      # idx -> SMEM
        grid=(1,),
        in_specs=[
            pl.BlockSpec(memory_space=pl.ANY),                 # emb1 table (HBM)
            pl.BlockSpec(memory_space=pl.ANY),                 # emb2 table (HBM)
            pl.BlockSpec((D, D), lambda i, idx: (0, 0)),       # W1 (out, in)
            pl.BlockSpec((1, D), lambda i, idx: (0, 0)),       # b1
            pl.BlockSpec((D, D), lambda i, idx: (0, 0)),       # W2 (out, in)
            pl.BlockSpec((1, D), lambda i, idx: (0, 0)),       # b2
            pl.BlockSpec((N, N), lambda i, idx: (0, 0)),       # random perturbation
        ],
        out_specs=pl.BlockSpec((N, N), lambda i, idx: (0, 0)),
        scratch_shapes=[
            pltpu.VMEM((N, D), f32),                # gathered emb1 rows
            pltpu.VMEM((N, D), f32),                # gathered emb2 rows
            pltpu.SemaphoreType.DMA((2,)),          # one DMA sem per table
        ],
    )

    # TODO(synk): at production N (thousands of nodes) this single-program body
    # must be row-tiled (TM rows x full N columns per program) to respect
    # v7x's 64 MiB VMEM; at the toy size here a single program is optimal.
    return pl.pallas_call(
        kernel,
        out_shape=jax.ShapeDtypeStruct((N, N), f32),
        grid_spec=grid_spec,
        compiler_params=pltpu.CompilerParams(
            dimension_semantics=("arbitrary",)),
    )(
        idx.astype(jnp.int32),
        emb1.astype(f32),
        emb2.astype(f32),
        w1.astype(f32),
        b1.reshape(1, D).astype(f32),
        w2.astype(f32),
        b2.reshape(1, D).astype(f32),
        rand_nn.astype(f32),
    )


if __name__ == "__main__":
    # Module hyper-parameters (GraphConstructor.__init__ with static_feat=None).
    nodes = 20     # embedding table size
    dim = 32       # embedding + linear dim
    n_sel = 16     # len(idx) -> adjacency is (16, 16)
    k = 4          # top-k neighbours kept per row
    alpha = 3.0

    key = jax.random.PRNGKey(0)
    k_e1, k_e2, k_w1, k_b1, k_w2, k_b2, k_rand, k_idx = jax.random.split(key, 8)

    # Deterministic synthetic parameters (shapes from __init__).
    emb1 = jax.random.normal(k_e1, (nodes, dim), dtype=jnp.float32)   # nn.Embedding
    emb2 = jax.random.normal(k_e2, (nodes, dim), dtype=jnp.float32)
    w1 = jax.random.normal(k_w1, (dim, dim), dtype=jnp.float32) * 0.1  # nn.Linear.weight (out, in)
    b1 = jax.random.normal(k_b1, (dim,), dtype=jnp.float32) * 0.1
    w2 = jax.random.normal(k_w2, (dim, dim), dtype=jnp.float32) * 0.1
    b2 = jax.random.normal(k_b2, (dim,), dtype=jnp.float32) * 0.1

    # Forward input: a shuffled subset of node ids (exercises the fused gather).
    idx = jax.random.permutation(k_idx, nodes)[:n_sel].astype(jnp.int32)

    # rand_like(adj) replacement: deterministic uniform [0,1) noise.
    rand_nn = jax.random.uniform(k_rand, (n_sel, n_sel), dtype=jnp.float32)

    adj = graph_constructor_forward(idx, emb1, emb2, w1, b1, w2, b2, rand_nn,
                                    alpha=alpha, k=k)
    adj = jax.block_until_ready(adj)

    # Lightweight sanity checks against a pure-JAX reference.
    e1s, e2s = emb1[idx], emb2[idx]
    nv1 = jnp.tanh(alpha * (e1s @ w1.T + b1))
    nv2 = jnp.tanh(alpha * (e2s @ w2.T + b2))
    a_ref = nv1 @ nv2.T - nv2 @ nv1.T
    adj_full = jnp.maximum(jnp.tanh(alpha * a_ref), 0.0)
    pert = adj_full + rand_nn * 0.01
    thresh = jnp.sort(pert, axis=1)[:, -k][:, None]
    adj_ref = adj_full * (pert >= thresh).astype(jnp.float32)

    assert adj.shape == (n_sel, n_sel)
    assert int(jnp.sum(jnp.abs(adj) > 0)) <= n_sel * k
    assert jnp.allclose(adj, adj_ref, atol=1e-5), "mismatch vs JAX reference"

    print("KERNEL_OK")
</pallas_src>

<mosaic_0001>
module attributes {stable_mosaic.version = 11 : i64} {
  func.func @_graph_constructor_kernel(%arg0: i32, %arg1: memref<16xi32, #tpu.memory_space<smem>>, %arg2: memref<20x32xf32, #tpu.memory_space<any>>, %arg3: memref<20x32xf32, #tpu.memory_space<any>>, %arg4: memref<32x32xf32, #tpu.memory_space<vmem>>, %arg5: memref<1x32xf32, #tpu.memory_space<vmem>>, %arg6: memref<32x32xf32, #tpu.memory_space<vmem>>, %arg7: memref<1x32xf32, #tpu.memory_space<vmem>>, %arg8: memref<16x16xf32, #tpu.memory_space<vmem>>, %arg9: memref<16x16xf32, #tpu.memory_space<vmem>>, %arg10: memref<16x32xf32, #tpu.memory_space<vmem>>, %arg11: memref<16x32xf32, #tpu.memory_space<vmem>>, %arg12: memref<2x!tpu.dma_semaphore, #tpu.memory_space<semaphore_mem>>) attributes {dimension_semantics = [#tpu.dimension_semantics<arbitrary>], iteration_bounds = array<i64: 1>, scalar_prefetch = 1 : i64, scratch_operands = 3 : i64, tpu.core_type = #tpu.core_type<tc>, window_params = [{}, {}, {pipeline_mode = #tpu.pipeline_mode<synchronous>, transform_indices = @transform_2, window_bounds = array<i64: 32, 32>}, {pipeline_mode = #tpu.pipeline_mode<synchronous>, transform_indices = @transform_3, window_bounds = array<i64: 1, 32>}, {pipeline_mode = #tpu.pipeline_mode<synchronous>, transform_indices = @transform_4, window_bounds = array<i64: 32, 32>}, {pipeline_mode = #tpu.pipeline_mode<synchronous>, transform_indices = @transform_5, window_bounds = array<i64: 1, 32>}, {pipeline_mode = #tpu.pipeline_mode<synchronous>, transform_indices = @transform_6, window_bounds = array<i64: 16, 16>}, {pipeline_mode = #tpu.pipeline_mode<synchronous>, transform_indices = @transform_7, window_bounds = array<i64: 16, 16>}]} {
    %c0 = arith.constant 0 : index
    %0 = memref.load %arg1[%c0] : memref<16xi32, #tpu.memory_space<smem>>
    %c0_i32 = arith.constant 0 : i32
    %c0_i32_0 = arith.constant 0 : i32
    %1 = tpu.memref_slice %arg2[%0, %c0_i32_0] : memref<20x32xf32, #tpu.memory_space<any>> -> memref<1x32xf32, #tpu.memory_space<any>>
    %c0_i32_1 = arith.constant 0 : i32
    %c0_i32_2 = arith.constant 0 : i32
    %2 = tpu.memref_slice %arg10[%c0_i32_1, %c0_i32_2] : memref<16x32xf32, #tpu.memory_space<vmem>> -> memref<1x32xf32, #tpu.memory_space<vmem>>
    %3 = tpu.memref_slice %arg12[%c0_i32] : memref<2x!tpu.dma_semaphore, #tpu.memory_space<semaphore_mem>> -> memref<1x!tpu.dma_semaphore, #tpu.memory_space<semaphore_mem>>
    %4 = tpu.memref_squeeze %3 : memref<1x!tpu.dma_semaphore, #tpu.memory_space<semaphore_mem>> -> memref<!tpu.dma_semaphore, #tpu.memory_space<semaphore_mem>>
    tpu.enqueue_dma source(%1 : memref<1x32xf32, #tpu.memory_space<any>>) target(%2 : memref<1x32xf32, #tpu.memory_space<vmem>>) target_semaphore(%4 : memref<!tpu.dma_semaphore, #tpu.memory_space<semaphore_mem>>)
    %c0_3 = arith.constant 0 : index
    %5 = memref.load %arg1[%c0_3] : memref<16xi32, #tpu.memory_space<smem>>
    %c1_i32 = arith.constant 1 : i32
    %c0_i32_4 = arith.constant 0 : i32
    %6 = tpu.memref_slice %arg3[%5, %c0_i32_4] : memref<20x32xf32, #tpu.memory_space<any>> -> memref<1x32xf32, #tpu.memory_space<any>>
    %c0_i32_5 = arith.constant 0 : i32
    %c0_i32_6 = arith.constant 0 : i32
    %7 = tpu.memref_slice %arg11[%c0_i32_5, %c0_i32_6] : memref<16x32xf32, #tpu.memory_space<vmem>> -> memref<1x32xf32, #tpu.memory_space<vmem>>
    %8 = tpu.memref_slice %arg12[%c1_i32] : memref<2x!tpu.dma_semaphore, #tpu.memory_space<semaphore_mem>> -> memref<1x!tpu.dma_semaphore, #tpu.memory_space<semaphore_mem>>
    %9 = tpu.memref_squeeze %8 : memref<1x!tpu.dma_semaphore, #tpu.memory_space<semaphore_mem>> -> memref<!tpu.dma_semaphore, #tpu.memory_space<semaphore_mem>>
    tpu.enqueue_dma source(%6 : memref<1x32xf32, #tpu.memory_space<any>>) target(%7 : memref<1x32xf32, #tpu.memory_space<vmem>>) target_semaphore(%9 : memref<!tpu.dma_semaphore, #tpu.memory_space<semaphore_mem>>)
    %c1 = arith.constant 1 : index
    %10 = memref.load %arg1[%c1] : memref<16xi32, #tpu.memory_space<smem>>
    %c0_i32_7 = arith.constant 0 : i32
    %c0_i32_8 = arith.constant 0 : i32
    %11 = tpu.memref_slice %arg2[%10, %c0_i32_8] : memref<20x32xf32, #tpu.memory_space<any>> -> memref<1x32xf32, #tpu.memory_space<any>>
    %c1_i32_9 = arith.constant 1 : i32
    %c0_i32_10 = arith.constant 0 : i32
    %12 = tpu.memref_slice %arg10[%c1_i32_9, %c0_i32_10] : memref<16x32xf32, #tpu.memory_space<vmem>> -> memref<1x32xf32, #tpu.memory_space<vmem>>
    %13 = tpu.memref_slice %arg12[%c0_i32_7] : memref<2x!tpu.dma_semaphore, #tpu.memory_space<semaphore_mem>> -> memref<1x!tpu.dma_semaphore, #tpu.memory_space<semaphore_mem>>
    %14 = tpu.memref_squeeze %13 : memref<1x!tpu.dma_semaphore, #tpu.memory_space<semaphore_mem>> -> memref<!tpu.dma_semaphore, #tpu.memory_space<semaphore_mem>>
    tpu.enqueue_dma source(%11 : memref<1x32xf32, #tpu.memory_space<any>>) target(%12 : memref<1x32xf32, #tpu.memory_space<vmem>>) target_semaphore(%14 : memref<!tpu.dma_semaphore, #tpu.memory_space<semaphore_mem>>)
    %c1_11 = arith.constant 1 : index
    %15 = memref.load %arg1[%c1_11] : memref<16xi32, #tpu.memory_space<smem>>
    %c1_i32_12 = arith.constant 1 : i32
    %c0_i32_13 = arith.constant 0 : i32
    %16 = tpu.memref_slice %arg3[%15, %c0_i32_13] : memref<20x32xf32, #tpu.memory_space<any>> -> memref<1x32xf32, #tpu.memory_space<any>>
    %c1_i32_14 = arith.constant 1 : i32
    %c0_i32_15 = arith.constant 0 : i32
    %17 = tpu.memref_slice %arg11[%c1_i32_14, %c0_i32_15] : memref<16x32xf32, #tpu.memory_space<vmem>> -> memref<1x32xf32, #tpu.memory_space<vmem>>
    %18 = tpu.memref_slice %arg12[%c1_i32_12] : memref<2x!tpu.dma_semaphore, #tpu.memory_space<semaphore_mem>> -> memref<1x!tpu.dma_semaphore, #tpu.memory_space<semaphore_mem>>
    %19 = tpu.memref_squeeze %18 : memref<1x!tpu.dma_semaphore, #tpu.memory_space<semaphore_mem>> -> memref<!tpu.dma_semaphore, #tpu.memory_space<semaphore_mem>>
    tpu.enqueue_dma source(%16 : memref<1x32xf32, #tpu.memory_space<any>>) target(%17 : memref<1x32xf32, #tpu.memory_space<vmem>>) target_semaphore(%19 : memref<!tpu.dma_semaphore, #tpu.memory_space<semaphore_mem>>)
    %c2 = arith.constant 2 : index
    %20 = memref.load %arg1[%c2] : memref<16xi32, #tpu.memory_space<smem>>
    %c0_i32_16 = arith.constant 0 : i32
    %c0_i32_17 = arith.constant 0 : i32
    %21 = tpu.memref_slice %arg2[%20, %c0_i32_17] : memref<20x32xf32, #tpu.memory_space<any>> -> memref<1x32xf32, #tpu.memory_space<any>>
    %c2_i32 = arith.constant 2 : i32
    %c0_i32_18 = arith.constant 0 : i32
    %22 = tpu.memref_slice %arg10[%c2_i32, %c0_i32_18] : memref<16x32xf32, #tpu.memory_space<vmem>> -> memref<1x32xf32, #tpu.memory_space<vmem>>
    %23 = tpu.memref_slice %arg12[%c0_i32_16] : memref<2x!tpu.dma_semaphore, #tpu.memory_space<semaphore_mem>> -> memref<1x!tpu.dma_semaphore, #tpu.memory_space<semaphore_mem>>
    %24 = tpu.memref_squeeze %23 : memref<1x!tpu.dma_semaphore, #tpu.memory_space<semaphore_mem>> -> memref<!tpu.dma_semaphore, #tpu.memory_space<semaphore_mem>>
    tpu.enqueue_dma source(%21 : memref<1x32xf32, #tpu.memory_space<any>>) target(%22 : memref<1x32xf32, #tpu.memory_space<vmem>>) target_semaphore(%24 : memref<!tpu.dma_semaphore, #tpu.memory_space<semaphore_mem>>)
    %c2_19 = arith.constant 2 : index
    %25 = memref.load %arg1[%c2_19] : memref<16xi32, #tpu.memory_space<smem>>
    %c1_i32_20 = arith.constant 1 : i32
    %c0_i32_21 = arith.constant 0 : i32
    %26 = tpu.memref_slice %arg3[%25, %c0_i32_21] : memref<20x32xf32, #tpu.memory_space<any>> -> memref<1x32xf32, #tpu.memory_space<any>>
    %c2_i32_22 = arith.constant 2 : i32
    %c0_i32_23 = arith.constant 0 : i32
    %27 = tpu.memref_slice %arg11[%c2_i32_22, %c0_i32_23] : memref<16x32xf32, #tpu.memory_space<vmem>> -> memref<1x32xf32, #tpu.memory_space<vmem>>
    %28 = tpu.memref_slice %arg12[%c1_i32_20] : memref<2x!tpu.dma_semaphore, #tpu.memory_space<semaphore_mem>> -> memref<1x!tpu.dma_semaphore, #tpu.memory_space<semaphore_mem>>
    %29 = tpu.memref_squeeze %28 : memref<1x!tpu.dma_semaphore, #tpu.memory_space<semaphore_mem>> -> memref<!tpu.dma_semaphore, #tpu.memory_space<semaphore_mem>>
    tpu.enqueue_dma source(%26 : memref<1x32xf32, #tpu.memory_space<any>>) target(%27 : memref<1x32xf32, #tpu.memory_space<vmem>>) target_semaphore(%29 : memref<!tpu.dma_semaphore, #tpu.memory_space<semaphore_mem>>)
    %c3 = arith.constant 3 : index
    %30 = memref.load %arg1[%c3] : memref<16xi32, #tpu.memory_space<smem>>
    %c0_i32_24 = arith.constant 0 : i32
    %c0_i32_25 = arith.constant 0 : i32
    %31 = tpu.memref_slice %arg2[%30, %c0_i32_25] : memref<20x32xf32, #tpu.memory_space<any>> -> memref<1x32xf32, #tpu.memory_space<any>>
    %c3_i32 = arith.constant 3 : i32
    %c0_i32_26 = arith.constant 0 : i32
    %32 = tpu.memref_slice %arg10[%c3_i32, %c0_i32_26] : memref<16x32xf32, #tpu.memory_space<vmem>> -> memref<1x32xf32, #tpu.memory_space<vmem>>
    %33 = tpu.memref_slice %arg12[%c0_i32_24] : memref<2x!tpu.dma_semaphore, #tpu.memory_space<semaphore_mem>> -> memref<1x!tpu.dma_semaphore, #tpu.memory_space<semaphore_mem>>
    %34 = tpu.memref_squeeze %33 : memref<1x!tpu.dma_semaphore, #tpu.memory_space<semaphore_mem>> -> memref<!tpu.dma_semaphore, #tpu.memory_space<semaphore_mem>>
    tpu.enqueue_dma source(%31 : memref<1x32xf32, #tpu.memory_space<any>>) target(%32 : memref<1x32xf32, #tpu.memory_space<vmem>>) target_semaphore(%34 : memref<!tpu.dma_semaphore, #tpu.memory_space<semaphore_mem>>)
    %c3_27 = arith.constant 3 : index
    %35 = memref.load %arg1[%c3_27] : memref<16xi32, #tpu.memory_space<smem>>
    %c1_i32_28 = arith.constant 1 : i32
    %c0_i32_29 = arith.constant 0 : i32
    %36 = tpu.memref_slice %arg3[%35, %c0_i32_29] : memref<20x32xf32, #tpu.memory_space<any>> -> memref<1x32xf32, #tpu.memory_space<any>>
    %c3_i32_30 = arith.constant 3 : i32
    %c0_i32_31 = arith.constant 0 : i32
    %37 = tpu.memref_slice %arg11[%c3_i32_30, %c0_i32_31] : memref<16x32xf32, #tpu.memory_space<vmem>> -> memref<1x32xf32, #tpu.memory_space<vmem>>
    %38 = tpu.memref_slice %arg12[%c1_i32_28] : memref<2x!tpu.dma_semaphore, #tpu.memory_space<semaphore_mem>> -> memref<1x!tpu.dma_semaphore, #tpu.memory_space<semaphore_mem>>
    %39 = tpu.memref_squeeze %38 : memref<1x!tpu.dma_semaphore, #tpu.memory_space<semaphore_mem>> -> memref<!tpu.dma_semaphore, #tpu.memory_space<semaphore_mem>>
    tpu.enqueue_dma source(%36 : memref<1x32xf32, #tpu.memory_space<any>>) target(%37 : memref<1x32xf32, #tpu.memory_space<vmem>>) target_semaphore(%39 : memref<!tpu.dma_semaphore, #tpu.memory_space<semaphore_mem>>)
    %c4 = arith.constant 4 : index
    %40 = memref.load %arg1[%c4] : memref<16xi32, #tpu.memory_space<smem>>
    %c0_i32_32 = arith.constant 0 : i32
    %c0_i32_33 = arith.constant 0 : i32
    %41 = tpu.memref_slice %arg2[%40, %c0_i32_33] : memref<20x32xf32, #tpu.memory_space<any>> -> memref<1x32xf32, #tpu.memory_space<any>>
    %c4_i32 = arith.constant 4 : i32
    %c0_i32_34 = arith.constant 0 : i32
    %42 = tpu.memref_slice %arg10[%c4_i32, %c0_i32_34] : memref<16x32xf32, #tpu.memory_space<vmem>> -> memref<1x32xf32, #tpu.memory_space<vmem>>
    %43 = tpu.memref_slice %arg12[%c0_i32_32] : memref<2x!tpu.dma_semaphore, #tpu.memory_space<semaphore_mem>> -> memref<1x!tpu.dma_semaphore, #tpu.memory_space<semaphore_mem>>
    %44 = tpu.memref_squeeze %43 : memref<1x!tpu.dma_semaphore, #tpu.memory_space<semaphore_mem>> -> memref<!tpu.dma_semaphore, #tpu.memory_space<semaphore_mem>>
    tpu.enqueue_dma source(%41 : memref<1x32xf32, #tpu.memory_space<any>>) target(%42 : memref<1x32xf32, #tpu.memory_space<vmem>>) target_semaphore(%44 : memref<!tpu.dma_semaphore, #tpu.memory_space<semaphore_mem>>)
    %c4_35 = arith.constant 4 : index
    %45 = memref.load %arg1[%c4_35] : memref<16xi32, #tpu.memory_space<smem>>
    %c1_i32_36 = arith.constant 1 : i32
    %c0_i32_37 = arith.constant 0 : i32
    %46 = tpu.memref_slice %arg3[%45, %c0_i32_37] : memref<20x32xf32, #tpu.memory_space<any>> -> memref<1x32xf32, #tpu.memory_space<any>>
    %c4_i32_38 = arith.constant 4 : i32
    %c0_i32_39 = arith.constant 0 : i32
    %47 = tpu.memref_slice %arg11[%c4_i32_38, %c0_i32_39] : memref<16x32xf32, #tpu.memory_space<vmem>> -> memref<1x32xf32, #tpu.memory_space<vmem>>
    %48 = tpu.memref_slice %arg12[%c1_i32_36] : memref<2x!tpu.dma_semaphore, #tpu.memory_space<semaphore_mem>> -> memref<1x!tpu.dma_semaphore, #tpu.memory_space<semaphore_mem>>
    %49 = tpu.memref_squeeze %48 : memref<1x!tpu.dma_semaphore, #tpu.memory_space<semaphore_mem>> -> memref<!tpu.dma_semaphore, #tpu.memory_space<semaphore_mem>>
    tpu.enqueue_dma source(%46 : memref<1x32xf32, #tpu.memory_space<any>>) target(%47 : memref<1x32xf32, #tpu.memory_space<vmem>>) target_semaphore(%49 : memref<!tpu.dma_semaphore, #tpu.memory_space<semaphore_mem>>)
    %c5 = arith.constant 5 : index
    %50 = memref.load %arg1[%c5] : memref<16xi32, #tpu.memory_space<smem>>
    %c0_i32_40 = arith.constant 0 : i32
    %c0_i32_41 = arith.constant 0 : i32
    %51 = tpu.memref_slice %arg2[%50, %c0_i32_41] : memref<20x32xf32, #tpu.memory_space<any>> -> memref<1x32xf32, #tpu.memory_space<any>>
    %c5_i32 = arith.constant 5 : i32
    %c0_i32_42 = arith.constant 0 : i32
    %52 = tpu.memref_slice %arg10[%c5_i32, %c0_i32_42] : memref<16x32xf32, #tpu.memory_space<vmem>> -> memref<1x32xf32, #tpu.memory_space<vmem>>
    %53 = tpu.memref_slice %arg12[%c0_i32_40] : memref<2x!tpu.dma_semaphore, #tpu.memory_space<semaphore_mem>> -> memref<1x!tpu.dma_semaphore, #tpu.memory_space<semaphore_mem>>
    %54 = tpu.memref_squeeze %53 : memref<1x!tpu.dma_semaphore, #tpu.memory_space<semaphore_mem>> -> memref<!tpu.dma_semaphore, #tpu.memory_space<semaphore_mem>>
    tpu.enqueue_dma source(%51 : memref<1x32xf32, #tpu.memory_space<any>>) target(%52 : memref<1x32xf32, #tpu.memory_space<vmem>>) target_semaphore(%54 : memref<!tpu.dma_semaphore, #tpu.memory_space<semaphore_mem>>)
    %c5_43 = arith.constant 5 : index
    %55 = memref.load %arg1[%c5_43] : memref<16xi32, #tpu.memory_space<smem>>
    %c1_i32_44 = arith.constant 1 : i32
    %c0_i32_45 = arith.constant 0 : i32
    %56 = tpu.memref_slice %arg3[%55, %c0_i32_45] : memref<20x32xf32, #tpu.memory_space<any>> -> memref<1x32xf32, #tpu.memory_space<any>>
    %c5_i32_46 = arith.constant 5 : i32
    %c0_i32_47 = arith.constant 0 : i32
    %57 = tpu.memref_slice %arg11[%c5_i32_46, %c0_i32_47] : memref<16x32xf32, #tpu.memory_space<vmem>> -> memref<1x32xf32, #tpu.memory_space<vmem>>
    %58 = tpu.memref_slice %arg12[%c1_i32_44] : memref<2x!tpu.dma_semaphore, #tpu.memory_space<semaphore_mem>> -> memref<1x!tpu.dma_semaphore, #tpu.memory_space<semaphore_mem>>
    %59 = tpu.memref_squeeze %58 : memref<1x!tpu.dma_semaphore, #tpu.memory_space<semaphore_mem>> -> memref<!tpu.dma_semaphore, #tpu.memory_space<semaphore_mem>>
    tpu.enqueue_dma source(%56 : memref<1x32xf32, #tpu.memory_space<any>>) target(%57 : memref<1x32xf32, #tpu.memory_space<vmem>>) target_semaphore(%59 : memref<!tpu.dma_semaphore, #tpu.memory_space<semaphore_mem>>)
    %c6 = arith.constant 6 : index
    %60 = memref.load %arg1[%c6] : memref<16xi32, #tpu.memory_space<smem>>
    %c0_i32_48 = arith.constant 0 : i32
    %c0_i32_49 = arith.constant 0 : i32
    %61 = tpu.memref_slice %arg2[%60, %c0_i32_49] : memref<20x32xf32, #tpu.memory_space<any>> -> memref<1x32xf32, #tpu.memory_space<any>>
    %c6_i32 = arith.constant 6 : i32
    %c0_i32_50 = arith.constant 0 : i32
    %62 = tpu.memref_slice %arg10[%c6_i32, %c0_i32_50] : memref<16x32xf32, #tpu.memory_space<vmem>> -> memref<1x32xf32, #tpu.memory_space<vmem>>
    %63 = tpu.memref_slice %arg12[%c0_i32_48] : memref<2x!tpu.dma_semaphore, #tpu.memory_space<semaphore_mem>> -> memref<1x!tpu.dma_semaphore, #tpu.memory_space<semaphore_mem>>
    %64 = tpu.memref_squeeze %63 : memref<1x!tpu.dma_semaphore, #tpu.memory_space<semaphore_mem>> -> memref<!tpu.dma_semaphore, #tpu.memory_space<semaphore_mem>>
    tpu.enqueue_dma source(%61 : memref<1x32xf32, #tpu.memory_space<any>>) target(%62 : memref<1x32xf32, #tpu.memory_space<vmem>>) target_semaphore(%64 : memref<!tpu.dma_semaphore, #tpu.memory_space<semaphore_mem>>)
    %c6_51 = arith.constant 6 : index
    %65 = memref.load %arg1[%c6_51] : memref<16xi32, #tpu.memory_space<smem>>
    %c1_i32_52 = arith.constant 1 : i32
    %c0_i32_53 = arith.constant 0 : i32
    %66 = tpu.memref_slice %arg3[%65, %c0_i32_53] : memref<20x32xf32, #tpu.memory_space<any>> -> memref<1x32xf32, #tpu.memory_space<any>>
    %c6_i32_54 = arith.constant 6 : i32
    %c0_i32_55 = arith.constant 0 : i32
    %67 = tpu.memref_slice %arg11[%c6_i32_54, %c0_i32_55] : memref<16x32xf32, #tpu.memory_space<vmem>> -> memref<1x32xf32, #tpu.memory_space<vmem>>
    %68 = tpu.memref_slice %arg12[%c1_i32_52] : memref<2x!tpu.dma_semaphore, #tpu.memory_space<semaphore_mem>> -> memref<1x!tpu.dma_semaphore, #tpu.memory_space<semaphore_mem>>
    %69 = tpu.memref_squeeze %68 : memref<1x!tpu.dma_semaphore, #tpu.memory_space<semaphore_mem>> -> memref<!tpu.dma_semaphore, #tpu.memory_space<semaphore_mem>>
    tpu.enqueue_dma source(%66 : memref<1x32xf32, #tpu.memory_space<any>>) target(%67 : memref<1x32xf32, #tpu.memory_space<vmem>>) target_semaphore(%69 : memref<!tpu.dma_semaphore, #tpu.memory_space<semaphore_mem>>)
    %c7 = arith.constant 7 : index
    %70 = memref.load %arg1[%c7] : memref<16xi32, #tpu.memory_space<smem>>
    %c0_i32_56 = arith.constant 0 : i32
    %c0_i32_57 = arith.constant 0 : i32
    %71 = tpu.memref_slice %arg2[%70, %c0_i32_57] : memref<20x32xf32, #tpu.memory_space<any>> -> memref<1x32xf32, #tpu.memory_space<any>>
    %c7_i32 = arith.constant 7 : i32
    %c0_i32_58 = arith.constant 0 : i32
    %72 = tpu.memref_slice %arg10[%c7_i32, %c0_i32_58] : memref<16x32xf32, #tpu.memory_space<vmem>> -> memref<1x32xf32, #tpu.memory_space<vmem>>
    %73 = tpu.memref_slice %arg12[%c0_i32_56] : memref<2x!tpu.dma_semaphore, #tpu.memory_space<semaphore_mem>> -> memref<1x!tpu.dma_semaphore, #tpu.memory_space<semaphore_mem>>
    %74 = tpu.memref_squeeze %73 : memref<1x!tpu.dma_semaphore, #tpu.memory_space<semaphore_mem>> -> memref<!tpu.dma_semaphore, #tpu.memory_space<semaphore_mem>>
    tpu.enqueue_dma source(%71 : memref<1x32xf32, #tpu.memory_space<any>>) target(%72 : memref<1x32xf32, #tpu.memory_space<vmem>>) target_semaphore(%74 : memref<!tpu.dma_semaphore, #tpu.memory_space<semaphore_mem>>)
    %c7_59 = arith.constant 7 : index
    %75 = memref.load %arg1[%c7_59] : memref<16xi32, #tpu.memory_space<smem>>
    %c1_i32_60 = arith.constant 1 : i32
    %c0_i32_61 = arith.constant 0 : i32
    %76 = tpu.memref_slice %arg3[%75, %c0_i32_61] : memref<20x32xf32, #tpu.memory_space<any>> -> memref<1x32xf32, #tpu.memory_space<any>>
    %c7_i32_62 = arith.constant 7 : i32
    %c0_i32_63 = arith.constant 0 : i32
    %77 = tpu.memref_slice %arg11[%c7_i32_62, %c0_i32_63] : memref<16x32xf32, #tpu.memory_space<vmem>> -> memref<1x32xf32, #tpu.memory_space<vmem>>
    %78 = tpu.memref_slice %arg12[%c1_i32_60] : memref<2x!tpu.dma_semaphore, #tpu.memory_space<semaphore_mem>> -> memref<1x!tpu.dma_semaphore, #tpu.memory_space<semaphore_mem>>
    %79 = tpu.memref_squeeze %78 : memref<1x!tpu.dma_semaphore, #tpu.memory_space<semaphore_mem>> -> memref<!tpu.dma_semaphore, #tpu.memory_space<semaphore_mem>>
    tpu.enqueue_dma source(%76 : memref<1x32xf32, #tpu.memory_space<any>>) target(%77 : memref<1x32xf32, #tpu.memory_space<vmem>>) target_semaphore(%79 : memref<!tpu.dma_semaphore, #tpu.memory_space<semaphore_mem>>)
    %c8 = arith.constant 8 : index
    %80 = memref.load %arg1[%c8] : memref<16xi32, #tpu.memory_space<smem>>
    %c0_i32_64 = arith.constant 0 : i32
    %c0_i32_65 = arith.constant 0 : i32
    %81 = tpu.memref_slice %arg2[%80, %c0_i32_65] : memref<20x32xf32, #tpu.memory_space<any>> -> memref<1x32xf32, #tpu.memory_space<any>>
    %c8_i32 = arith.constant 8 : i32
    %c0_i32_66 = arith.constant 0 : i32
    %82 = tpu.memref_slice %arg10[%c8_i32, %c0_i32_66] : memref<16x32xf32, #tpu.memory_space<vmem>> -> memref<1x32xf32, #tpu.memory_space<vmem>>
    %83 = tpu.memref_slice %arg12[%c0_i32_64] : memref<2x!tpu.dma_semaphore, #tpu.memory_space<semaphore_mem>> -> memref<1x!tpu.dma_semaphore, #tpu.memory_space<semaphore_mem>>
    %84 = tpu.memref_squeeze %83 : memref<1x!tpu.dma_semaphore, #tpu.memory_space<semaphore_mem>> -> memref<!tpu.dma_semaphore, #tpu.memory_space<semaphore_mem>>
    tpu.enqueue_dma source(%81 : memref<1x32xf32, #tpu.memory_space<any>>) target(%82 : memref<1x32xf32, #tpu.memory_space<vmem>>) target_semaphore(%84 : memref<!tpu.dma_semaphore, #tpu.memory_space<semaphore_mem>>)
    %c8_67 = arith.constant 8 : index
    %85 = memref.load %arg1[%c8_67] : memref<16xi32, #tpu.memory_space<smem>>
    %c1_i32_68 = arith.constant 1 : i32
    %c0_i32_69 = arith.constant 0 : i32
    %86 = tpu.memref_slice %arg3[%85, %c0_i32_69] : memref<20x32xf32, #tpu.memory_space<any>> -> memref<1x32xf32, #tpu.memory_space<any>>
    %c8_i32_70 = arith.constant 8 : i32
    %c0_i32_71 = arith.constant 0 : i32
    %87 = tpu.memref_slice %arg11[%c8_i32_70, %c0_i32_71] : memref<16x32xf32, #tpu.memory_space<vmem>> -> memref<1x32xf32, #tpu.memory_space<vmem>>
    %88 = tpu.memref_slice %arg12[%c1_i32_68] : memref<2x!tpu.dma_semaphore, #tpu.memory_space<semaphore_mem>> -> memref<1x!tpu.dma_semaphore, #tpu.memory_space<semaphore_mem>>
    %89 = tpu.memref_squeeze %88 : memref<1x!tpu.dma_semaphore, #tpu.memory_space<semaphore_mem>> -> memref<!tpu.dma_semaphore, #tpu.memory_space<semaphore_mem>>
    tpu.enqueue_dma source(%86 : memref<1x32xf32, #tpu.memory_space<any>>) target(%87 : memref<1x32xf32, #tpu.memory_space<vmem>>) target_semaphore(%89 : memref<!tpu.dma_semaphore, #tpu.memory_space<semaphore_mem>>)
    %c9 = arith.constant 9 : index
    %90 = memref.load %arg1[%c9] : memref<16xi32, #tpu.memory_space<smem>>
    %c0_i32_72 = arith.constant 0 : i32
    %c0_i32_73 = arith.constant 0 : i32
    %91 = tpu.memref_slice %arg2[%90, %c0_i32_73] : memref<20x32xf32, #tpu.memory_space<any>> -> memref<1x32xf32, #tpu.memory_space<any>>
    %c9_i32 = arith.constant 9 : i32
    %c0_i32_74 = arith.constant 0 : i32
    %92 = tpu.memref_slice %arg10[%c9_i32, %c0_i32_74] : memref<16x32xf32, #tpu.memory_space<vmem>> -> memref<1x32xf32, #tpu.memory_space<vmem>>
    %93 = tpu.memref_slice %arg12[%c0_i32_72] : memref<2x!tpu.dma_semaphore, #tpu.memory_space<semaphore_mem>> -> memref<1x!tpu.dma_semaphore, #tpu.memory_space<semaphore_mem>>
    %94 = tpu.memref_squeeze %93 : memref<1x!tpu.dma_semaphore, #tpu.memory_space<semaphore_mem>> -> memref<!tpu.dma_semaphore, #tpu.memory_space<semaphore_mem>>
    tpu.enqueue_dma source(%91 : memref<1x32xf32, #tpu.memory_space<any>>) target(%92 : memref<1x32xf32, #tpu.memory_space<vmem>>) target_semaphore(%94 : memref<!tpu.dma_semaphore, #tpu.memory_space<semaphore_mem>>)
    %c9_75 = arith.constant 9 : index
    %95 = memref.load %arg1[%c9_75] : memref<16xi32, #tpu.memory_space<smem>>
    %c1_i32_76 = arith.constant 1 : i32
    %c0_i32_77 = arith.constant 0 : i32
    %96 = tpu.memref_slice %arg3[%95, %c0_i32_77] : memref<20x32xf32, #tpu.memory_space<any>> -> memref<1x32xf32, #tpu.memory_space<any>>
    %c9_i32_78 = arith.constant 9 : i32
    %c0_i32_79 = arith.constant 0 : i32
    %97 = tpu.memref_slice %arg11[%c9_i32_78, %c0_i32_79] : memref<16x32xf32, #tpu.memory_space<vmem>> -> memref<1x32xf32, #tpu.memory_space<vmem>>
    %98 = tpu.memref_slice %arg12[%c1_i32_76] : memref<2x!tpu.dma_semaphore, #tpu.memory_space<semaphore_mem>> -> memref<1x!tpu.dma_semaphore, #tpu.memory_space<semaphore_mem>>
    %99 = tpu.memref_squeeze %98 : memref<1x!tpu.dma_semaphore, #tpu.memory_space<semaphore_mem>> -> memref<!tpu.dma_semaphore, #tpu.memory_space<semaphore_mem>>
    tpu.enqueue_dma source(%96 : memref<1x32xf32, #tpu.memory_space<any>>) target(%97 : memref<1x32xf32, #tpu.memory_space<vmem>>) target_semaphore(%99 : memref<!tpu.dma_semaphore, #tpu.memory_space<semaphore_mem>>)
    %c10 = arith.constant 10 : index
    %100 = memref.load %arg1[%c10] : memref<16xi32, #tpu.memory_space<smem>>
    %c0_i32_80 = arith.constant 0 : i32
    %c0_i32_81 = arith.constant 0 : i32
    %101 = tpu.memref_slice %arg2[%100, %c0_i32_81] : memref<20x32xf32, #tpu.memory_space<any>> -> memref<1x32xf32, #tpu.memory_space<any>>
    %c10_i32 = arith.constant 10 : i32
    %c0_i32_82 = arith.constant 0 : i32
    %102 = tpu.memref_slice %arg10[%c10_i32, %c0_i32_82] : memref<16x32xf32, #tpu.memory_space<vmem>> -> memref<1x32xf32, #tpu.memory_space<vmem>>
    %103 = tpu.memref_slice %arg12[%c0_i32_80] : memref<2x!tpu.dma_semaphore, #tpu.memory_space<semaphore_mem>> -> memref<1x!tpu.dma_semaphore, #tpu.memory_space<semaphore_mem>>
    %104 = tpu.memref_squeeze %103 : memref<1x!tpu.dma_semaphore, #tpu.memory_space<semaphore_mem>> -> memref<!tpu.dma_semaphore, #tpu.memory_space<semaphore_mem>>
    tpu.enqueue_dma source(%101 : memref<1x32xf32, #tpu.memory_space<any>>) target(%102 : memref<1x32xf32, #tpu.memory_space<vmem>>) target_semaphore(%104 : memref<!tpu.dma_semaphore, #tpu.memory_space<semaphore_mem>>)
    %c10_83 = arith.constant 10 : index
    %105 = memref.load %arg1[%c10_83] : memref<16xi32, #tpu.memory_space<smem>>
    %c1_i32_84 = arith.constant 1 : i32
    %c0_i32_85 = arith.constant 0 : i32
    %106 = tpu.memref_slice %arg3[%105, %c0_i32_85] : memref<20x32xf32, #tpu.memory_space<any>> -> memref<1x32xf32, #tpu.memory_space<any>>
    %c10_i32_86 = arith.constant 10 : i32
    %c0_i32_87 = arith.constant 0 : i32
    %107 = tpu.memref_slice %arg11[%c10_i32_86, %c0_i32_87] : memref<16x32xf32, #tpu.memory_space<vmem>> -> memref<1x32xf32, #tpu.memory_space<vmem>>
    %108 = tpu.memref_slice %arg12[%c1_i32_84] : memref<2x!tpu.dma_semaphore, #tpu.memory_space<semaphore_mem>> -> memref<1x!tpu.dma_semaphore, #tpu.memory_space<semaphore_mem>>
    %109 = tpu.memref_squeeze %108 : memref<1x!tpu.dma_semaphore, #tpu.memory_space<semaphore_mem>> -> memref<!tpu.dma_semaphore, #tpu.memory_space<semaphore_mem>>
    tpu.enqueue_dma source(%106 : memref<1x32xf32, #tpu.memory_space<any>>) target(%107 : memref<1x32xf32, #tpu.memory_space<vmem>>) target_semaphore(%109 : memref<!tpu.dma_semaphore, #tpu.memory_space<semaphore_mem>>)
    %c11 = arith.constant 11 : index
    %110 = memref.load %arg1[%c11] : memref<16xi32, #tpu.memory_space<smem>>
    %c0_i32_88 = arith.constant 0 : i32
    %c0_i32_89 = arith.constant 0 : i32
    %111 = tpu.memref_slice %arg2[%110, %c0_i32_89] : memref<20x32xf32, #tpu.memory_space<any>> -> memref<1x32xf32, #tpu.memory_space<any>>
    %c11_i32 = arith.constant 11 : i32
    %c0_i32_90 = arith.constant 0 : i32
    %112 = tpu.memref_slice %arg10[%c11_i32, %c0_i32_90] : memref<16x32xf32, #tpu.memory_space<vmem>> -> memref<1x32xf32, #tpu.memory_space<vmem>>
    %113 = tpu.memref_slice %arg12[%c0_i32_88] : memref<2x!tpu.dma_semaphore, #tpu.memory_space<semaphore_mem>> -> memref<1x!tpu.dma_semaphore, #tpu.memory_space<semaphore_mem>>
    %114 = tpu.memref_squeeze %113 : memref<1x!tpu.dma_semaphore, #tpu.memory_space<semaphore_mem>> -> memref<!tpu.dma_semaphore, #tpu.memory_space<semaphore_mem>>
    tpu.enqueue_dma source(%111 : memref<1x32xf32, #tpu.memory_space<any>>) target(%112 : memref<1x32xf32, #tpu.memory_space<vmem>>) target_semaphore(%114 : memref<!tpu.dma_semaphore, #tpu.memory_space<semaphore_mem>>)
    %c11_91 = arith.constant 11 : index
    %115 = memref.load %arg1[%c11_91] : memref<16xi32, #tpu.memory_space<smem>>
    %c1_i32_92 = arith.constant 1 : i32
    %c0_i32_93 = arith.constant 0 : i32
    %116 = tpu.memref_slice %arg3[%115, %c0_i32_93] : memref<20x32xf32, #tpu.memory_space<any>> -> memref<1x32xf32, #tpu.memory_space<any>>
    %c11_i32_94 = arith.constant 11 : i32
    %c0_i32_95 = arith.constant 0 : i32
    %117 = tpu.memref_slice %arg11[%c11_i32_94, %c0_i32_95] : memref<16x32xf32, #tpu.memory_space<vmem>> -> memref<1x32xf32, #tpu.memory_space<vmem>>
    %118 = tpu.memref_slice %arg12[%c1_i32_92] : memref<2x!tpu.dma_semaphore, #tpu.memory_space<semaphore_mem>> -> memref<1x!tpu.dma_semaphore, #tpu.memory_space<semaphore_mem>>
    %119 = tpu.memref_squeeze %118 : memref<1x!tpu.dma_semaphore, #tpu.memory_space<semaphore_mem>> -> memref<!tpu.dma_semaphore, #tpu.memory_space<semaphore_mem>>
    tpu.enqueue_dma source(%116 : memref<1x32xf32, #tpu.memory_space<any>>) target(%117 : memref<1x32xf32, #tpu.memory_space<vmem>>) target_semaphore(%119 : memref<!tpu.dma_semaphore, #tpu.memory_space<semaphore_mem>>)
    %c12 = arith.constant 12 : index
    %120 = memref.load %arg1[%c12] : memref<16xi32, #tpu.memory_space<smem>>
    %c0_i32_96 = arith.constant 0 : i32
    %c0_i32_97 = arith.constant 0 : i32
    %121 = tpu.memref_slice %arg2[%120, %c0_i32_97] : memref<20x32xf32, #tpu.memory_space<any>> -> memref<1x32xf32, #tpu.memory_space<any>>
    %c12_i32 = arith.constant 12 : i32
    %c0_i32_98 = arith.constant 0 : i32
    %122 = tpu.memref_slice %arg10[%c12_i32, %c0_i32_98] : memref<16x32xf32, #tpu.memory_space<vmem>> -> memref<1x32xf32, #tpu.memory_space<vmem>>
    %123 = tpu.memref_slice %arg12[%c0_i32_96] : memref<2x!tpu.dma_semaphore, #tpu.memory_space<semaphore_mem>> -> memref<1x!tpu.dma_semaphore, #tpu.memory_space<semaphore_mem>>
    %124 = tpu.memref_squeeze %123 : memref<1x!tpu.dma_semaphore, #tpu.memory_space<semaphore_mem>> -> memref<!tpu.dma_semaphore, #tpu.memory_space<semaphore_mem>>
    tpu.enqueue_dma source(%121 : memref<1x32xf32, #tpu.memory_space<any>>) target(%122 : memref<1x32xf32, #tpu.memory_space<vmem>>) target_semaphore(%124 : memref<!tpu.dma_semaphore, #tpu.memory_space<semaphore_mem>>)
    %c12_99 = arith.constant 12 : index
    %125 = memref.load %arg1[%c12_99] : memref<16xi32, #tpu.memory_space<smem>>
    %c1_i32_100 = arith.constant 1 : i32
    %c0_i32_101 = arith.constant 0 : i32
    %126 = tpu.memref_slice %arg3[%125, %c0_i32_101] : memref<20x32xf32, #tpu.memory_space<any>> -> memref<1x32xf32, #tpu.memory_space<any>>
    %c12_i32_102 = arith.constant 12 : i32
    %c0_i32_103 = arith.constant 0 : i32
    %127 = tpu.memref_slice %arg11[%c12_i32_102, %c0_i32_103] : memref<16x32xf32, #tpu.memory_space<vmem>> -> memref<1x32xf32, #tpu.memory_space<vmem>>
    %128 = tpu.memref_slice %arg12[%c1_i32_100] : memref<2x!tpu.dma_semaphore, #tpu.memory_space<semaphore_mem>> -> memref<1x!tpu.dma_semaphore, #tpu.memory_space<semaphore_mem>>
    %129 = tpu.memref_squeeze %128 : memref<1x!tpu.dma_semaphore, #tpu.memory_space<semaphore_mem>> -> memref<!tpu.dma_semaphore, #tpu.memory_space<semaphore_mem>>
    tpu.enqueue_dma source(%126 : memref<1x32xf32, #tpu.memory_space<any>>) target(%127 : memref<1x32xf32, #tpu.memory_space<vmem>>) target_semaphore(%129 : memref<!tpu.dma_semaphore, #tpu.memory_space<semaphore_mem>>)
    %c13 = arith.constant 13 : index
    %130 = memref.load %arg1[%c13] : memref<16xi32, #tpu.memory_space<smem>>
    %c0_i32_104 = arith.constant 0 : i32
    %c0_i32_105 = arith.constant 0 : i32
    %131 = tpu.memref_slice %arg2[%130, %c0_i32_105] : memref<20x32xf32, #tpu.memory_space<any>> -> memref<1x32xf32, #tpu.memory_space<any>>
    %c13_i32 = arith.constant 13 : i32
    %c0_i32_106 = arith.constant 0 : i32
    %132 = tpu.memref_slice %arg10[%c13_i32, %c0_i32_106] : memref<16x32xf32, #tpu.memory_space<vmem>> -> memref<1x32xf32, #tpu.memory_space<vmem>>
    %133 = tpu.memref_slice %arg12[%c0_i32_104] : memref<2x!tpu.dma_semaphore, #tpu.memory_space<semaphore_mem>> -> memref<1x!tpu.dma_semaphore, #tpu.memory_space<semaphore_mem>>
    %134 = tpu.memref_squeeze %133 : memref<1x!tpu.dma_semaphore, #tpu.memory_space<semaphore_mem>> -> memref<!tpu.dma_semaphore, #tpu.memory_space<semaphore_mem>>
    tpu.enqueue_dma source(%131 : memref<1x32xf32, #tpu.memory_space<any>>) target(%132 : memref<1x32xf32, #tpu.memory_space<vmem>>) target_semaphore(%134 : memref<!tpu.dma_semaphore, #tpu.memory_space<semaphore_mem>>)
    %c13_107 = arith.constant 13 : index
    %135 = memref.load %arg1[%c13_107] : memref<16xi32, #tpu.memory_space<smem>>
    %c1_i32_108 = arith.constant 1 : i32
    %c0_i32_109 = arith.constant 0 : i32
    %136 = tpu.memref_slice %arg3[%135, %c0_i32_109] : memref<20x32xf32, #tpu.memory_space<any>> -> memref<1x32xf32, #tpu.memory_space<any>>
    %c13_i32_110 = arith.constant 13 : i32
    %c0_i32_111 = arith.constant 0 : i32
    %137 = tpu.memref_slice %arg11[%c13_i32_110, %c0_i32_111] : memref<16x32xf32, #tpu.memory_space<vmem>> -> memref<1x32xf32, #tpu.memory_space<vmem>>
    %138 = tpu.memref_slice %arg12[%c1_i32_108] : memref<2x!tpu.dma_semaphore, #tpu.memory_space<semaphore_mem>> -> memref<1x!tpu.dma_semaphore, #tpu.memory_space<semaphore_mem>>
    %139 = tpu.memref_squeeze %138 : memref<1x!tpu.dma_semaphore, #tpu.memory_space<semaphore_mem>> -> memref<!tpu.dma_semaphore, #tpu.memory_space<semaphore_mem>>
    tpu.enqueue_dma source(%136 : memref<1x32xf32, #tpu.memory_space<any>>) target(%137 : memref<1x32xf32, #tpu.memory_space<vmem>>) target_semaphore(%139 : memref<!tpu.dma_semaphore, #tpu.memory_space<semaphore_mem>>)
    %c14 = arith.constant 14 : index
    %140 = memref.load %arg1[%c14] : memref<16xi32, #tpu.memory_space<smem>>
    %c0_i32_112 = arith.constant 0 : i32
    %c0_i32_113 = arith.constant 0 : i32
    %141 = tpu.memref_slice %arg2[%140, %c0_i32_113] : memref<20x32xf32, #tpu.memory_space<any>> -> memref<1x32xf32, #tpu.memory_space<any>>
    %c14_i32 = arith.constant 14 : i32
    %c0_i32_114 = arith.constant 0 : i32
    %142 = tpu.memref_slice %arg10[%c14_i32, %c0_i32_114] : memref<16x32xf32, #tpu.memory_space<vmem>> -> memref<1x32xf32, #tpu.memory_space<vmem>>
    %143 = tpu.memref_slice %arg12[%c0_i32_112] : memref<2x!tpu.dma_semaphore, #tpu.memory_space<semaphore_mem>> -> memref<1x!tpu.dma_semaphore, #tpu.memory_space<semaphore_mem>>
    %144 = tpu.memref_squeeze %143 : memref<1x!tpu.dma_semaphore, #tpu.memory_space<semaphore_mem>> -> memref<!tpu.dma_semaphore, #tpu.memory_space<semaphore_mem>>
    tpu.enqueue_dma source(%141 : memref<1x32xf32, #tpu.memory_space<any>>) target(%142 : memref<1x32xf32, #tpu.memory_space<vmem>>) target_semaphore(%144 : memref<!tpu.dma_semaphore, #tpu.memory_space<semaphore_mem>>)
    %c14_115 = arith.constant 14 : index
    %145 = memref.load %arg1[%c14_115] : memref<16xi32, #tpu.memory_space<smem>>
    %c1_i32_116 = arith.constant 1 : i32
    %c0_i32_117 = arith.constant 0 : i32
    %146 = tpu.memref_slice %arg3[%145, %c0_i32_117] : memref<20x32xf32, #tpu.memory_space<any>> -> memref<1x32xf32, #tpu.memory_space<any>>
    %c14_i32_118 = arith.constant 14 : i32
    %c0_i32_119 = arith.constant 0 : i32
    %147 = tpu.memref_slice %arg11[%c14_i32_118, %c0_i32_119] : memref<16x32xf32, #tpu.memory_space<vmem>> -> memref<1x32xf32, #tpu.memory_space<vmem>>
    %148 = tpu.memref_slice %arg12[%c1_i32_116] : memref<2x!tpu.dma_semaphore, #tpu.memory_space<semaphore_mem>> -> memref<1x!tpu.dma_semaphore, #tpu.memory_space<semaphore_mem>>
    %149 = tpu.memref_squeeze %148 : memref<1x!tpu.dma_semaphore, #tpu.memory_space<semaphore_mem>> -> memref<!tpu.dma_semaphore, #tpu.memory_space<semaphore_mem>>
    tpu.enqueue_dma source(%146 : memref<1x32xf32, #tpu.memory_space<any>>) target(%147 : memref<1x32xf32, #tpu.memory_space<vmem>>) target_semaphore(%149 : memref<!tpu.dma_semaphore, #tpu.memory_space<semaphore_mem>>)
    %c15 = arith.constant 15 : index
    %150 = memref.load %arg1[%c15] : memref<16xi32, #tpu.memory_space<smem>>
    %c0_i32_120 = arith.constant 0 : i32
    %c0_i32_121 = arith.constant 0 : i32
    %151 = tpu.memref_slice %arg2[%150, %c0_i32_121] : memref<20x32xf32, #tpu.memory_space<any>> -> memref<1x32xf32, #tpu.memory_space<any>>
    %c15_i32 = arith.constant 15 : i32
    %c0_i32_122 = arith.constant 0 : i32
    %152 = tpu.memref_slice %arg10[%c15_i32, %c0_i32_122] : memref<16x32xf32, #tpu.memory_space<vmem>> -> memref<1x32xf32, #tpu.memory_space<vmem>>
    %153 = tpu.memref_slice %arg12[%c0_i32_120] : memref<2x!tpu.dma_semaphore, #tpu.memory_space<semaphore_mem>> -> memref<1x!tpu.dma_semaphore, #tpu.memory_space<semaphore_mem>>
    %154 = tpu.memref_squeeze %153 : memref<1x!tpu.dma_semaphore, #tpu.memory_space<semaphore_mem>> -> memref<!tpu.dma_semaphore, #tpu.memory_space<semaphore_mem>>
    tpu.enqueue_dma source(%151 : memref<1x32xf32, #tpu.memory_space<any>>) target(%152 : memref<1x32xf32, #tpu.memory_space<vmem>>) target_semaphore(%154 : memref<!tpu.dma_semaphore, #tpu.memory_space<semaphore_mem>>)
    %c15_123 = arith.constant 15 : index
    %155 = memref.load %arg1[%c15_123] : memref<16xi32, #tpu.memory_space<smem>>
    %c1_i32_124 = arith.constant 1 : i32
    %c0_i32_125 = arith.constant 0 : i32
    %156 = tpu.memref_slice %arg3[%155, %c0_i32_125] : memref<20x32xf32, #tpu.memory_space<any>> -> memref<1x32xf32, #tpu.memory_space<any>>
    %c15_i32_126 = arith.constant 15 : i32
    %c0_i32_127 = arith.constant 0 : i32
    %157 = tpu.memref_slice %arg11[%c15_i32_126, %c0_i32_127] : memref<16x32xf32, #tpu.memory_space<vmem>> -> memref<1x32xf32, #tpu.memory_space<vmem>>
    %158 = tpu.memref_slice %arg12[%c1_i32_124] : memref<2x!tpu.dma_semaphore, #tpu.memory_space<semaphore_mem>> -> memref<1x!tpu.dma_semaphore, #tpu.memory_space<semaphore_mem>>
    %159 = tpu.memref_squeeze %158 : memref<1x!tpu.dma_semaphore, #tpu.memory_space<semaphore_mem>> -> memref<!tpu.dma_semaphore, #tpu.memory_space<semaphore_mem>>
    tpu.enqueue_dma source(%156 : memref<1x32xf32, #tpu.memory_space<any>>) target(%157 : memref<1x32xf32, #tpu.memory_space<vmem>>) target_semaphore(%159 : memref<!tpu.dma_semaphore, #tpu.memory_space<semaphore_mem>>)
    %c0_i32_128 = arith.constant 0 : i32
    %c0_i32_129 = arith.constant 0 : i32
    %c0_i32_130 = arith.constant 0 : i32
    %160 = tpu.memref_slice %arg2[%c0_i32_129, %c0_i32_130] : memref<20x32xf32, #tpu.memory_space<any>> -> memref<1x32xf32, #tpu.memory_space<any>>
    %c0_i32_131 = arith.constant 0 : i32
    %c0_i32_132 = arith.constant 0 : i32
    %161 = tpu.memref_slice %arg10[%c0_i32_131, %c0_i32_132] : memref<16x32xf32, #tpu.memory_space<vmem>> -> memref<1x32xf32, #tpu.memory_space<vmem>>
    %162 = tpu.memref_slice %arg12[%c0_i32_128] : memref<2x!tpu.dma_semaphore, #tpu.memory_space<semaphore_mem>> -> memref<1x!tpu.dma_semaphore, #tpu.memory_space<semaphore_mem>>
    %163 = tpu.memref_squeeze %162 : memref<1x!tpu.dma_semaphore, #tpu.memory_space<semaphore_mem>> -> memref<!tpu.dma_semaphore, #tpu.memory_space<semaphore_mem>>
    tpu.wait_dma2 semaphore(%163 : memref<!tpu.dma_semaphore, #tpu.memory_space<semaphore_mem>>) src(%160 : memref<1x32xf32, #tpu.memory_space<any>>) dst(%161 : memref<1x32xf32, #tpu.memory_space<vmem>>)
    %c1_i32_133 = arith.constant 1 : i32
    %c0_i32_134 = arith.constant 0 : i32
    %c0_i32_135 = arith.constant 0 : i32
    %164 = tpu.memref_slice %arg3[%c0_i32_134, %c0_i32_135] : memref<20x32xf32, #tpu.memory_space<any>> -> memref<1x32xf32, #tpu.memory_space<any>>
    %c0_i32_136 = arith.constant 0 : i32
    %c0_i32_137 = arith.constant 0 : i32
    %165 = tpu.memref_slice %arg11[%c0_i32_136, %c0_i32_137] : memref<16x32xf32, #tpu.memory_space<vmem>> -> memref<1x32xf32, #tpu.memory_space<vmem>>
    %166 = tpu.memref_slice %arg12[%c1_i32_133] : memref<2x!tpu.dma_semaphore, #tpu.memory_space<semaphore_mem>> -> memref<1x!tpu.dma_semaphore, #tpu.memory_space<semaphore_mem>>
    %167 = tpu.memref_squeeze %166 : memref<1x!tpu.dma_semaphore, #tpu.memory_space<semaphore_mem>> -> memref<!tpu.dma_semaphore, #tpu.memory_space<semaphore_mem>>
    tpu.wait_dma2 semaphore(%167 : memref<!tpu.dma_semaphore, #tpu.memory_space<semaphore_mem>>) src(%164 : memref<1x32xf32, #tpu.memory_space<any>>) dst(%165 : memref<1x32xf32, #tpu.memory_space<vmem>>)
    %c0_i32_138 = arith.constant 0 : i32
    %c0_i32_139 = arith.constant 0 : i32
    %c0_i32_140 = arith.constant 0 : i32
    %168 = tpu.memref_slice %arg2[%c0_i32_139, %c0_i32_140] : memref<20x32xf32, #tpu.memory_space<any>> -> memref<1x32xf32, #tpu.memory_space<any>>
    %c1_i32_141 = arith.constant 1 : i32
    %c0_i32_142 = arith.constant 0 : i32
    %169 = tpu.memref_slice %arg10[%c1_i32_141, %c0_i32_142] : memref<16x32xf32, #tpu.memory_space<vmem>> -> memref<1x32xf32, #tpu.memory_space<vmem>>
    %170 = tpu.memref_slice %arg12[%c0_i32_138] : memref<2x!tpu.dma_semaphore, #tpu.memory_space<semaphore_mem>> -> memref<1x!tpu.dma_semaphore, #tpu.memory_space<semaphore_mem>>
    %171 = tpu.memref_squeeze %170 : memref<1x!tpu.dma_semaphore, #tpu.memory_space<semaphore_mem>> -> memref<!tpu.dma_semaphore, #tpu.memory_space<semaphore_mem>>
    tpu.wait_dma2 semaphore(%171 : memref<!tpu.dma_semaphore, #tpu.memory_space<semaphore_mem>>) src(%168 : memref<1x32xf32, #tpu.memory_space<any>>) dst(%169 : memref<1x32xf32, #tpu.memory_space<vmem>>)
    %c1_i32_143 = arith.constant 1 : i32
    %c0_i32_144 = arith.constant 0 : i32
    %c0_i32_145 = arith.constant 0 : i32
    %172 = tpu.memref_slice %arg3[%c0_i32_144, %c0_i32_145] : memref<20x32xf32, #tpu.memory_space<any>> -> memref<1x32xf32, #tpu.memory_space<any>>
    %c1_i32_146 = arith.constant 1 : i32
    %c0_i32_147 = arith.constant 0 : i32
    %173 = tpu.memref_slice %arg11[%c1_i32_146, %c0_i32_147] : memref<16x32xf32, #tpu.memory_space<vmem>> -> memref<1x32xf32, #tpu.memory_space<vmem>>
    %174 = tpu.memref_slice %arg12[%c1_i32_143] : memref<2x!tpu.dma_semaphore, #tpu.memory_space<semaphore_mem>> -> memref<1x!tpu.dma_semaphore, #tpu.memory_space<semaphore_mem>>
    %175 = tpu.memref_squeeze %174 : memref<1x!tpu.dma_semaphore, #tpu.memory_space<semaphore_mem>> -> memref<!tpu.dma_semaphore, #tpu.memory_space<semaphore_mem>>
    tpu.wait_dma2 semaphore(%175 : memref<!tpu.dma_semaphore, #tpu.memory_space<semaphore_mem>>) src(%172 : memref<1x32xf32, #tpu.memory_space<any>>) dst(%173 : memref<1x32xf32, #tpu.memory_space<vmem>>)
    %c0_i32_148 = arith.constant 0 : i32
    %c0_i32_149 = arith.constant 0 : i32
    %c0_i32_150 = arith.constant 0 : i32
    %176 = tpu.memref_slice %arg2[%c0_i32_149, %c0_i32_150] : memref<20x32xf32, #tpu.memory_space<any>> -> memref<1x32xf32, #tpu.memory_space<any>>
    %c2_i32_151 = arith.constant 2 : i32
    %c0_i32_152 = arith.constant 0 : i32
    %177 = tpu.memref_slice %arg10[%c2_i32_151, %c0_i32_152] : memref<16x32xf32, #tpu.memory_space<vmem>> -> memref<1x32xf32, #tpu.memory_space<vmem>>
    %178 = tpu.memref_slice %arg12[%c0_i32_148] : memref<2x!tpu.dma_semaphore, #tpu.memory_space<semaphore_mem>> -> memref<1x!tpu.dma_semaphore, #tpu.memory_space<semaphore_mem>>
    %179 = tpu.memref_squeeze %178 : memref<1x!tpu.dma_semaphore, #tpu.memory_space<semaphore_mem>> -> memref<!tpu.dma_semaphore, #tpu.memory_space<semaphore_mem>>
    tpu.wait_dma2 semaphore(%179 : memref<!tpu.dma_semaphore, #tpu.memory_space<semaphore_mem>>) src(%176 : memref<1x32xf32, #tpu.memory_space<any>>) dst(%177 : memref<1x32xf32, #tpu.memory_space<vmem>>)
    %c1_i32_153 = arith.constant 1 : i32
    %c0_i32_154 = arith.constant 0 : i32
    %c0_i32_155 = arith.constant 0 : i32
    %180 = tpu.memref_slice %arg3[%c0_i32_154, %c0_i32_155] : memref<20x32xf32, #tpu.memory_space<any>> -> memref<1x32xf32, #tpu.memory_space<any>>
    %c2_i32_156 = arith.constant 2 : i32
    %c0_i32_157 = arith.constant 0 : i32
    %181 = tpu.memref_slice %arg11[%c2_i32_156, %c0_i32_157] : memref<16x32xf32, #tpu.memory_space<vmem>> -> memref<1x32xf32, #tpu.memory_space<vmem>>
    %182 = tpu.memref_slice %arg12[%c1_i32_153] : memref<2x!tpu.dma_semaphore, #tpu.memory_space<semaphore_mem>> -> memref<1x!tpu.dma_semaphore, #tpu.memory_space<semaphore_mem>>
    %183 = tpu.memref_squeeze %182 : memref<1x!tpu.dma_semaphore, #tpu.memory_space<semaphore_mem>> -> memref<!tpu.dma_semaphore, #tpu.memory_space<semaphore_mem>>
    tpu.wait_dma2 semaphore(%183 : memref<!tpu.dma_semaphore, #tpu.memory_space<semaphore_mem>>) src(%180 : memref<1x32xf32, #tpu.memory_space<any>>) dst(%181 : memref<1x32xf32, #tpu.memory_space<vmem>>)
    %c0_i32_158 = arith.constant 0 : i32
    %c0_i32_159 = arith.constant 0 : i32
    %c0_i32_160 = arith.constant 0 : i32
    %184 = tpu.memref_slice %arg2[%c0_i32_159, %c0_i32_160] : memref<20x32xf32, #tpu.memory_space<any>> -> memref<1x32xf32, #tpu.memory_space<any>>
    %c3_i32_161 = arith.constant 3 : i32
    %c0_i32_162 = arith.constant 0 : i32
    %185 = tpu.memref_slice %arg10[%c3_i32_161, %c0_i32_162] : memref<16x32xf32, #tpu.memory_space<vmem>> -> memref<1x32xf32, #tpu.memory_space<vmem>>
    %186 = tpu.memref_slice %arg12[%c0_i32_158] : memref<2x!tpu.dma_semaphore, #tpu.memory_space<semaphore_mem>> -> memref<1x!tpu.dma_semaphore, #tpu.memory_space<semaphore_mem>>
    %187 = tpu.memref_squeeze %186 : memref<1x!tpu.dma_semaphore, #tpu.memory_space<semaphore_mem>> -> memref<!tpu.dma_semaphore, #tpu.memory_space<semaphore_mem>>
    tpu.wait_dma2 semaphore(%187 : memref<!tpu.dma_semaphore, #tpu.memory_space<semaphore_mem>>) src(%184 : memref<1x32xf32, #tpu.memory_space<any>>) dst(%185 : memref<1x32xf32, #tpu.memory_space<vmem>>)
    %c1_i32_163 = arith.constant 1 : i32
    %c0_i32_164 = arith.constant 0 : i32
    %c0_i32_165 = arith.constant 0 : i32
    %188 = tpu.memref_slice %arg3[%c0_i32_164, %c0_i32_165] : memref<20x32xf32, #tpu.memory_space<any>> -> memref<1x32xf32, #tpu.memory_space<any>>
    %c3_i32_166 = arith.constant 3 : i32
    %c0_i32_167 = arith.constant 0 : i32
    %189 = tpu.memref_slice %arg11[%c3_i32_166, %c0_i32_167] : memref<16x32xf32, #tpu.memory_space<vmem>> -> memref<1x32xf32, #tpu.memory_space<vmem>>
    %190 = tpu.memref_slice %arg12[%c1_i32_163] : memref<2x!tpu.dma_semaphore, #tpu.memory_space<semaphore_mem>> -> memref<1x!tpu.dma_semaphore, #tpu.memory_space<semaphore_mem>>
    %191 = tpu.memref_squeeze %190 : memref<1x!tpu.dma_semaphore, #tpu.memory_space<semaphore_mem>> -> memref<!tpu.dma_semaphore, #tpu.memory_space<semaphore_mem>>
    tpu.wait_dma2 semaphore(%191 : memref<!tpu.dma_semaphore, #tpu.memory_space<semaphore_mem>>) src(%188 : memref<1x32xf32, #tpu.memory_space<any>>) dst(%189 : memref<1x32xf32, #tpu.memory_space<vmem>>)
    %c0_i32_168 = arith.constant 0 : i32
    %c0_i32_169 = arith.constant 0 : i32
    %c0_i32_170 = arith.constant 0 : i32
    %192 = tpu.memref_slice %arg2[%c0_i32_169, %c0_i32_170] : memref<20x32xf32, #tpu.memory_space<any>> -> memref<1x32xf32, #tpu.memory_space<any>>
    %c4_i32_171 = arith.constant 4 : i32
    %c0_i32_172 = arith.constant 0 : i32
    %193 = tpu.memref_slice %arg10[%c4_i32_171, %c0_i32_172] : memref<16x32xf32, #tpu.memory_space<vmem>> -> memref<1x32xf32, #tpu.memory_space<vmem>>
    %194 = tpu.memref_slice %arg12[%c0_i32_168] : memref<2x!tpu.dma_semaphore, #tpu.memory_space<semaphore_mem>> -> memref<1x!tpu.dma_semaphore, #tpu.memory_space<semaphore_mem>>
    %195 = tpu.memref_squeeze %194 : memref<1x!tpu.dma_semaphore, #tpu.memory_space<semaphore_mem>> -> memref<!tpu.dma_semaphore, #tpu.memory_space<semaphore_mem>>
    tpu.wait_dma2 semaphore(%195 : memref<!tpu.dma_semaphore, #tpu.memory_space<semaphore_mem>>) src(%192 : memref<1x32xf32, #tpu.memory_space<any>>) dst(%193 : memref<1x32xf32, #tpu.memory_space<vmem>>)
    %c1_i32_173 = arith.constant 1 : i32
    %c0_i32_174 = arith.constant 0 : i32
    %c0_i32_175 = arith.constant 0 : i32
    %196 = tpu.memref_slice %arg3[%c0_i32_174, %c0_i32_175] : memref<20x32xf32, #tpu.memory_space<any>> -> memref<1x32xf32, #tpu.memory_space<any>>
    %c4_i32_176 = arith.constant 4 : i32
    %c0_i32_177 = arith.constant 0 : i32
    %197 = tpu.memref_slice %arg11[%c4_i32_176, %c0_i32_177] : memref<16x32xf32, #tpu.memory_space<vmem>> -> memref<1x32xf32, #tpu.memory_space<vmem>>
    %198 = tpu.memref_slice %arg12[%c1_i32_173] : memref<2x!tpu.dma_semaphore, #tpu.memory_space<semaphore_mem>> -> memref<1x!tpu.dma_semaphore, #tpu.memory_space<semaphore_mem>>
    %199 = tpu.memref_squeeze %198 : memref<1x!tpu.dma_semaphore, #tpu.memory_space<semaphore_mem>> -> memref<!tpu.dma_semaphore, #tpu.memory_space<semaphore_mem>>
    tpu.wait_dma2 semaphore(%199 : memref<!tpu.dma_semaphore, #tpu.memory_space<semaphore_mem>>) src(%196 : memref<1x32xf32, #tpu.memory_space<any>>) dst(%197 : memref<1x32xf32, #tpu.memory_space<vmem>>)
    %c0_i32_178 = arith.constant 0 : i32
    %c0_i32_179 = arith.constant 0 : i32
    %c0_i32_180 = arith.constant 0 : i32
    %200 = tpu.memref_slice %arg2[%c0_i32_179, %c0_i32_180] : memref<20x32xf32, #tpu.memory_space<any>> -> memref<1x32xf32, #tpu.memory_space<any>>
    %c5_i32_181 = arith.constant 5 : i32
    %c0_i32_182 = arith.constant 0 : i32
    %201 = tpu.memref_slice %arg10[%c5_i32_181, %c0_i32_182] : memref<16x32xf32, #tpu.memory_space<vmem>> -> memref<1x32xf32, #tpu.memory_space<vmem>>
    %202 = tpu.memref_slice %arg12[%c0_i32_178] : memref<2x!tpu.dma_semaphore, #tpu.memory_space<semaphore_mem>> -> memref<1x!tpu.dma_semaphore, #tpu.memory_space<semaphore_mem>>
    %203 = tpu.memref_squeeze %202 : memref<1x!tpu.dma_semaphore, #tpu.memory_space<semaphore_mem>> -> memref<!tpu.dma_semaphore, #tpu.memory_space<semaphore_mem>>
    tpu.wait_dma2 semaphore(%203 : memref<!tpu.dma_semaphore, #tpu.memory_space<semaphore_mem>>) src(%200 : memref<1x32xf32, #tpu.memory_space<any>>) dst(%201 : memref<1x32xf32, #tpu.memory_space<vmem>>)
    %c1_i32_183 = arith.constant 1 : i32
    %c0_i32_184 = arith.constant 0 : i32
    %c0_i32_185 = arith.constant 0 : i32
    %204 = tpu.memref_slice %arg3[%c0_i32_184, %c0_i32_185] : memref<20x32xf32, #tpu.memory_space<any>> -> memref<1x32xf32, #tpu.memory_space<any>>
    %c5_i32_186 = arith.constant 5 : i32
    %c0_i32_187 = arith.constant 0 : i32
    %205 = tpu.memref_slice %arg11[%c5_i32_186, %c0_i32_187] : memref<16x32xf32, #tpu.memory_space<vmem>> -> memref<1x32xf32, #tpu.memory_space<vmem>>
    %206 = tpu.memref_slice %arg12[%c1_i32_183] : memref<2x!tpu.dma_semaphore, #tpu.memory_space<semaphore_mem>> -> memref<1x!tpu.dma_semaphore, #tpu.memory_space<semaphore_mem>>
    %207 = tpu.memref_squeeze %206 : memref<1x!tpu.dma_semaphore, #tpu.memory_space<semaphore_mem>> -> memref<!tpu.dma_semaphore, #tpu.memory_space<semaphore_mem>>
    tpu.wait_dma2 semaphore(%207 : memref<!tpu.dma_semaphore, #tpu.memory_space<semaphore_mem>>) src(%204 : memref<1x32xf32, #tpu.memory_space<any>>) dst(%205 : memref<1x32xf32, #tpu.memory_space<vmem>>)
    %c0_i32_188 = arith.constant 0 : i32
    %c0_i32_189 = arith.constant 0 : i32
    %c0_i32_190 = arith.constant 0 : i32
    %208 = tpu.memref_slice %arg2[%c0_i32_189, %c0_i32_190] : memref<20x32xf32, #tpu.memory_space<any>> -> memref<1x32xf32, #tpu.memory_space<any>>
    %c6_i32_191 = arith.constant 6 : i32
    %c0_i32_192 = arith.constant 0 : i32
    %209 = tpu.memref_slice %arg10[%c6_i32_191, %c0_i32_192] : memref<16x32xf32, #tpu.memory_space<vmem>> -> memref<1x32xf32, #tpu.memory_space<vmem>>
    %210 = tpu.memref_slice %arg12[%c0_i32_188] : memref<2x!tpu.dma_semaphore, #tpu.memory_space<semaphore_mem>> -> memref<1x!tpu.dma_semaphore, #tpu.memory_space<semaphore_mem>>
    %211 = tpu.memref_squeeze %210 : memref<1x!tpu.dma_semaphore, #tpu.memory_space<semaphore_mem>> -> memref<!tpu.dma_semaphore, #tpu.memory_space<semaphore_mem>>
    tpu.wait_dma2 semaphore(%211 : memref<!tpu.dma_semaphore, #tpu.memory_space<semaphore_mem>>) src(%208 : memref<1x32xf32, #tpu.memory_space<any>>) dst(%209 : memref<1x32xf32, #tpu.memory_space<vmem>>)
    %c1_i32_193 = arith.constant 1 : i32
    %c0_i32_194 = arith.constant 0 : i32
    %c0_i32_195 = arith.constant 0 : i32
    %212 = tpu.memref_slice %arg3[%c0_i32_194, %c0_i32_195] : memref<20x32xf32, #tpu.memory_space<any>> -> memref<1x32xf32, #tpu.memory_space<any>>
    %c6_i32_196 = arith.constant 6 : i32
    %c0_i32_197 = arith.constant 0 : i32
    %213 = tpu.memref_slice %arg11[%c6_i32_196, %c0_i32_197] : memref<16x32xf32, #tpu.memory_space<vmem>> -> memref<1x32xf32, #tpu.memory_space<vmem>>
    %214 = tpu.memref_slice %arg12[%c1_i32_193] : memref<2x!tpu.dma_semaphore, #tpu.memory_space<semaphore_mem>> -> memref<1x!tpu.dma_semaphore, #tpu.memory_space<semaphore_mem>>
    %215 = tpu.memref_squeeze %214 : memref<1x!tpu.dma_semaphore, #tpu.memory_space<semaphore_mem>> -> memref<!tpu.dma_semaphore, #tpu.memory_space<semaphore_mem>>
    tpu.wait_dma2 semaphore(%215 : memref<!tpu.dma_semaphore, #tpu.memory_space<semaphore_mem>>) src(%212 : memref<1x32xf32, #tpu.memory_space<any>>) dst(%213 : memref<1x32xf32, #tpu.memory_space<vmem>>)
    %c0_i32_198 = arith.constant 0 : i32
    %c0_i32_199 = arith.constant 0 : i32
    %c0_i32_200 = arith.constant 0 : i32
    %216 = tpu.memref_slice %arg2[%c0_i32_199, %c0_i32_200] : memref<20x32xf32, #tpu.memory_space<any>> -> memref<1x32xf32, #tpu.memory_space<any>>
    %c7_i32_201 = arith.constant 7 : i32
    %c0_i32_202 = arith.constant 0 : i32
    %217 = tpu.memref_slice %arg10[%c7_i32_201, %c0_i32_202] : memref<16x32xf32, #tpu.memory_space<vmem>> -> memref<1x32xf32, #tpu.memory_space<vmem>>
    %218 = tpu.memref_slice %arg12[%c0_i32_198] : memref<2x!tpu.dma_semaphore, #tpu.memory_space<semaphore_mem>> -> memref<1x!tpu.dma_semaphore, #tpu.memory_space<semaphore_mem>>
    %219 = tpu.memref_squeeze %218 : memref<1x!tpu.dma_semaphore, #tpu.memory_space<semaphore_mem>> -> memref<!tpu.dma_semaphore, #tpu.memory_space<semaphore_mem>>
    tpu.wait_dma2 semaphore(%219 : memref<!tpu.dma_semaphore, #tpu.memory_space<semaphore_mem>>) src(%216 : memref<1x32xf32, #tpu.memory_space<any>>) dst(%217 : memref<1x32xf32, #tpu.memory_space<vmem>>)
    %c1_i32_203 = arith.constant 1 : i32
    %c0_i32_204 = arith.constant 0 : i32
    %c0_i32_205 = arith.constant 0 : i32
    %220 = tpu.memref_slice %arg3[%c0_i32_204, %c0_i32_205] : memref<20x32xf32, #tpu.memory_space<any>> -> memref<1x32xf32, #tpu.memory_space<any>>
    %c7_i32_206 = arith.constant 7 : i32
    %c0_i32_207 = arith.constant 0 : i32
    %221 = tpu.memref_slice %arg11[%c7_i32_206, %c0_i32_207] : memref<16x32xf32, #tpu.memory_space<vmem>> -> memref<1x32xf32, #tpu.memory_space<vmem>>
    %222 = tpu.memref_slice %arg12[%c1_i32_203] : memref<2x!tpu.dma_semaphore, #tpu.memory_space<semaphore_mem>> -> memref<1x!tpu.dma_semaphore, #tpu.memory_space<semaphore_mem>>
    %223 = tpu.memref_squeeze %222 : memref<1x!tpu.dma_semaphore, #tpu.memory_space<semaphore_mem>> -> memref<!tpu.dma_semaphore, #tpu.memory_space<semaphore_mem>>
    tpu.wait_dma2 semaphore(%223 : memref<!tpu.dma_semaphore, #tpu.memory_space<semaphore_mem>>) src(%220 : memref<1x32xf32, #tpu.memory_space<any>>) dst(%221 : memref<1x32xf32, #tpu.memory_space<vmem>>)
    %c0_i32_208 = arith.constant 0 : i32
    %c0_i32_209 = arith.constant 0 : i32
    %c0_i32_210 = arith.constant 0 : i32
    %224 = tpu.memref_slice %arg2[%c0_i32_209, %c0_i32_210] : memref<20x32xf32, #tpu.memory_space<any>> -> memref<1x32xf32, #tpu.memory_space<any>>
    %c8_i32_211 = arith.constant 8 : i32
    %c0_i32_212 = arith.constant 0 : i32
    %225 = tpu.memref_slice %arg10[%c8_i32_211, %c0_i32_212] : memref<16x32xf32, #tpu.memory_space<vmem>> -> memref<1x32xf32, #tpu.memory_space<vmem>>
    %226 = tpu.memref_slice %arg12[%c0_i32_208] : memref<2x!tpu.dma_semaphore, #tpu.memory_space<semaphore_mem>> -> memref<1x!tpu.dma_semaphore, #tpu.memory_space<semaphore_mem>>
    %227 = tpu.memref_squeeze %226 : memref<1x!tpu.dma_semaphore, #tpu.memory_space<semaphore_mem>> -> memref<!tpu.dma_semaphore, #tpu.memory_space<semaphore_mem>>
    tpu.wait_dma2 semaphore(%227 : memref<!tpu.dma_semaphore, #tpu.memory_space<semaphore_mem>>) src(%224 : memref<1x32xf32, #tpu.memory_space<any>>) dst(%225 : memref<1x32xf32, #tpu.memory_space<vmem>>)
    %c1_i32_213 = arith.constant 1 : i32
    %c0_i32_214 = arith.constant 0 : i32
    %c0_i32_215 = arith.constant 0 : i32
    %228 = tpu.memref_slice %arg3[%c0_i32_214, %c0_i32_215] : memref<20x32xf32, #tpu.memory_space<any>> -> memref<1x32xf32, #tpu.memory_space<any>>
    %c8_i32_216 = arith.constant 8 : i32
    %c0_i32_217 = arith.constant 0 : i32
    %229 = tpu.memref_slice %arg11[%c8_i32_216, %c0_i32_217] : memref<16x32xf32, #tpu.memory_space<vmem>> -> memref<1x32xf32, #tpu.memory_space<vmem>>
    %230 = tpu.memref_slice %arg12[%c1_i32_213] : memref<2x!tpu.dma_semaphore, #tpu.memory_space<semaphore_mem>> -> memref<1x!tpu.dma_semaphore, #tpu.memory_space<semaphore_mem>>
    %231 = tpu.memref_squeeze %230 : memref<1x!tpu.dma_semaphore, #tpu.memory_space<semaphore_mem>> -> memref<!tpu.dma_semaphore, #tpu.memory_space<semaphore_mem>>
    tpu.wait_dma2 semaphore(%231 : memref<!tpu.dma_semaphore, #tpu.memory_space<semaphore_mem>>) src(%228 : memref<1x32xf32, #tpu.memory_space<any>>) dst(%229 : memref<1x32xf32, #tpu.memory_space<vmem>>)
    %c0_i32_218 = arith.constant 0 : i32
    %c0_i32_219 = arith.constant 0 : i32
    %c0_i32_220 = arith.constant 0 : i32
    %232 = tpu.memref_slice %arg2[%c0_i32_219, %c0_i32_220] : memref<20x32xf32, #tpu.memory_space<any>> -> memref<1x32xf32, #tpu.memory_space<any>>
    %c9_i32_221 = arith.constant 9 : i32
    %c0_i32_222 = arith.constant 0 : i32
    %233 = tpu.memref_slice %arg10[%c9_i32_221, %c0_i32_222] : memref<16x32xf32, #tpu.memory_space<vmem>> -> memref<1x32xf32, #tpu.memory_space<vmem>>
    %234 = tpu.memref_slice %arg12[%c0_i32_218] : memref<2x!tpu.dma_semaphore, #tpu.memory_space<semaphore_mem>> -> memref<1x!tpu.dma_semaphore, #tpu.memory_space<semaphore_mem>>
    %235 = tpu.memref_squeeze %234 : memref<1x!tpu.dma_semaphore, #tpu.memory_space<semaphore_mem>> -> memref<!tpu.dma_semaphore, #tpu.memory_space<semaphore_mem>>
    tpu.wait_dma2 semaphore(%235 : memref<!tpu.dma_semaphore, #tpu.memory_space<semaphore_mem>>) src(%232 : memref<1x32xf32, #tpu.memory_space<any>>) dst(%233 : memref<1x32xf32, #tpu.memory_space<vmem>>)
    %c1_i32_223 = arith.constant 1 : i32
    %c0_i32_224 = arith.constant 0 : i32
    %c0_i32_225 = arith.constant 0 : i32
    %236 = tpu.memref_slice %arg3[%c0_i32_224, %c0_i32_225] : memref<20x32xf32, #tpu.memory_space<any>> -> memref<1x32xf32, #tpu.memory_space<any>>
    %c9_i32_226 = arith.constant 9 : i32
    %c0_i32_227 = arith.constant 0 : i32
    %237 = tpu.memref_slice %arg11[%c9_i32_226, %c0_i32_227] : memref<16x32xf32, #tpu.memory_space<vmem>> -> memref<1x32xf32, #tpu.memory_space<vmem>>
    %238 = tpu.memref_slice %arg12[%c1_i32_223] : memref<2x!tpu.dma_semaphore, #tpu.memory_space<semaphore_mem>> -> memref<1x!tpu.dma_semaphore, #tpu.memory_space<semaphore_mem>>
    %239 = tpu.memref_squeeze %238 : memref<1x!tpu.dma_semaphore, #tpu.memory_space<semaphore_mem>> -> memref<!tpu.dma_semaphore, #tpu.memory_space<semaphore_mem>>
    tpu.wait_dma2 semaphore(%239 : memref<!tpu.dma_semaphore, #tpu.memory_space<semaphore_mem>>) src(%236 : memref<1x32xf32, #tpu.memory_space<any>>) dst(%237 : memref<1x32xf32, #tpu.memory_space<vmem>>)
    %c0_i32_228 = arith.constant 0 : i32
    %c0_i32_229 = arith.constant 0 : i32
    %c0_i32_230 = arith.constant 0 : i32
    %240 = tpu.memref_slice %arg2[%c0_i32_229, %c0_i32_230] : memref<20x32xf32, #tpu.memory_space<any>> -> memref<1x32xf32, #tpu.memory_space<any>>
    %c10_i32_231 = arith.constant 10 : i32
    %c0_i32_232 = arith.constant 0 : i32
    %241 = tpu.memref_slice %arg10[%c10_i32_231, %c0_i32_232] : memref<16x32xf32, #tpu.memory_space<vmem>> -> memref<1x32xf32, #tpu.memory_space<vmem>>
    %242 = tpu.memref_slice %arg12[%c0_i32_228] : memref<2x!tpu.dma_semaphore, #tpu.memory_space<semaphore_mem>> -> memref<1x!tpu.dma_semaphore, #tpu.memory_space<semaphore_mem>>
    %243 = tpu.memref_squeeze %242 : memref<1x!tpu.dma_semaphore, #tpu.memory_space<semaphore_mem>> -> memref<!tpu.dma_semaphore, #tpu.memory_space<semaphore_mem>>
    tpu.wait_dma2 semaphore(%243 : memref<!tpu.dma_semaphore, #tpu.memory_space<semaphore_mem>>) src(%240 : memref<1x32xf32, #tpu.memory_space<any>>) dst(%241 : memref<1x32xf32, #tpu.memory_space<vmem>>)
    %c1_i32_233 = arith.constant 1 : i32
    %c0_i32_234 = arith.constant 0 : i32
    %c0_i32_235 = arith.constant 0 : i32
    %244 = tpu.memref_slice %arg3[%c0_i32_234, %c0_i32_235] : memref<20x32xf32, #tpu.memory_space<any>> -> memref<1x32xf32, #tpu.memory_space<any>>
    %c10_i32_236 = arith.constant 10 : i32
    %c0_i32_237 = arith.constant 0 : i32
    %245 = tpu.memref_slice %arg11[%c10_i32_236, %c0_i32_237] : memref<16x32xf32, #tpu.memory_space<vmem>> -> memref<1x32xf32, #tpu.memory_space<vmem>>
    %246 = tpu.memref_slice %arg12[%c1_i32_233] : memref<2x!tpu.dma_semaphore, #tpu.memory_space<semaphore_mem>> -> memref<1x!tpu.dma_semaphore, #tpu.memory_space<semaphore_mem>>
    %247 = tpu.memref_squeeze %246 : memref<1x!tpu.dma_semaphore, #tpu.memory_space<semaphore_mem>> -> memref<!tpu.dma_semaphore, #tpu.memory_space<semaphore_mem>>
    tpu.wait_dma2 semaphore(%247 : memref<!tpu.dma_semaphore, #tpu.memory_space<semaphore_mem>>) src(%244 : memref<1x32xf32, #tpu.memory_space<any>>) dst(%245 : memref<1x32xf32, #tpu.memory_space<vmem>>)
    %c0_i32_238 = arith.constant 0 : i32
    %c0_i32_239 = arith.constant 0 : i32
    %c0_i32_240 = arith.constant 0 : i32
    %248 = tpu.memref_slice %arg2[%c0_i32_239, %c0_i32_240] : memref<20x32xf32, #tpu.memory_space<any>> -> memref<1x32xf32, #tpu.memory_space<any>>
    %c11_i32_241 = arith.constant 11 : i32
    %c0_i32_242 = arith.constant 0 : i32
    %249 = tpu.memref_slice %arg10[%c11_i32_241, %c0_i32_242] : memref<16x32xf32, #tpu.memory_space<vmem>> -> memref<1x32xf32, #tpu.memory_space<vmem>>
    %250 = tpu.memref_slice %arg12[%c0_i32_238] : memref<2x!tpu.dma_semaphore, #tpu.memory_space<semaphore_mem>> -> memref<1x!tpu.dma_semaphore, #tpu.memory_space<semaphore_mem>>
    %251 = tpu.memref_squeeze %250 : memref<1x!tpu.dma_semaphore, #tpu.memory_space<semaphore_mem>> -> memref<!tpu.dma_semaphore, #tpu.memory_space<semaphore_mem>>
    tpu.wait_dma2 semaphore(%251 : memref<!tpu.dma_semaphore, #tpu.memory_space<semaphore_mem>>) src(%248 : memref<1x32xf32, #tpu.memory_space<any>>) dst(%249 : memref<1x32xf32, #tpu.memory_space<vmem>>)
    %c1_i32_243 = arith.constant 1 : i32
    %c0_i32_244 = arith.constant 0 : i32
    %c0_i32_245 = arith.constant 0 : i32
    %252 = tpu.memref_slice %arg3[%c0_i32_244, %c0_i32_245] : memref<20x32xf32, #tpu.memory_space<any>> -> memref<1x32xf32, #tpu.memory_space<any>>
    %c11_i32_246 = arith.constant 11 : i32
    %c0_i32_247 = arith.constant 0 : i32
    %253 = tpu.memref_slice %arg11[%c11_i32_246, %c0_i32_247] : memref<16x32xf32, #tpu.memory_space<vmem>> -> memref<1x32xf32, #tpu.memory_space<vmem>>
    %254 = tpu.memref_slice %arg12[%c1_i32_243] : memref<2x!tpu.dma_semaphore, #tpu.memory_space<semaphore_mem>> -> memref<1x!tpu.dma_semaphore, #tpu.memory_space<semaphore_mem>>
    %255 = tpu.memref_squeeze %254 : memref<1x!tpu.dma_semaphore, #tpu.memory_space<semaphore_mem>> -> memref<!tpu.dma_semaphore, #tpu.memory_space<semaphore_mem>>
    tpu.wait_dma2 semaphore(%255 : memref<!tpu.dma_semaphore, #tpu.memory_space<semaphore_mem>>) src(%252 : memref<1x32xf32, #tpu.memory_space<any>>) dst(%253 : memref<1x32xf32, #tpu.memory_space<vmem>>)
    %c0_i32_248 = arith.constant 0 : i32
    %c0_i32_249 = arith.constant 0 : i32
    %c0_i32_250 = arith.constant 0 : i32
    %256 = tpu.memref_slice %arg2[%c0_i32_249, %c0_i32_250] : memref<20x32xf32, #tpu.memory_space<any>> -> memref<1x32xf32, #tpu.memory_space<any>>
    %c12_i32_251 = arith.constant 12 : i32
    %c0_i32_252 = arith.constant 0 : i32
    %257 = tpu.memref_slice %arg10[%c12_i32_251, %c0_i32_252] : memref<16x32xf32, #tpu.memory_space<vmem>> -> memref<1x32xf32, #tpu.memory_space<vmem>>
    %258 = tpu.memref_slice %arg12[%c0_i32_248] : memref<2x!tpu.dma_semaphore, #tpu.memory_space<semaphore_mem>> -> memref<1x!tpu.dma_semaphore, #tpu.memory_space<semaphore_mem>>
    %259 = tpu.memref_squeeze %258 : memref<1x!tpu.dma_semaphore, #tpu.memory_space<semaphore_mem>> -> memref<!tpu.dma_semaphore, #tpu.memory_space<semaphore_mem>>
    tpu.wait_dma2 semaphore(%259 : memref<!tpu.dma_semaphore, #tpu.memory_space<semaphore_mem>>) src(%256 : memref<1x32xf32, #tpu.memory_space<any>>) dst(%257 : memref<1x32xf32, #tpu.memory_space<vmem>>)
    %c1_i32_253 = arith.constant 1 : i32
    %c0_i32_254 = arith.constant 0 : i32
    %c0_i32_255 = arith.constant 0 : i32
    %260 = tpu.memref_slice %arg3[%c0_i32_254, %c0_i32_255] : memref<20x32xf32, #tpu.memory_space<any>> -> memref<1x32xf32, #tpu.memory_space<any>>
    %c12_i32_256 = arith.constant 12 : i32
    %c0_i32_257 = arith.constant 0 : i32
    %261 = tpu.memref_slice %arg11[%c12_i32_256, %c0_i32_257] : memref<16x32xf32, #tpu.memory_space<vmem>> -> memref<1x32xf32, #tpu.memory_space<vmem>>
    %262 = tpu.memref_slice %arg12[%c1_i32_253] : memref<2x!tpu.dma_semaphore, #tpu.memory_space<semaphore_mem>> -> memref<1x!tpu.dma_semaphore, #tpu.memory_space<semaphore_mem>>
    %263 = tpu.memref_squeeze %262 : memref<1x!tpu.dma_semaphore, #tpu.memory_space<semaphore_mem>> -> memref<!tpu.dma_semaphore, #tpu.memory_space<semaphore_mem>>
    tpu.wait_dma2 semaphore(%263 : memref<!tpu.dma_semaphore, #tpu.memory_space<semaphore_mem>>) src(%260 : memref<1x32xf32, #tpu.memory_space<any>>) dst(%261 : memref<1x32xf32, #tpu.memory_space<vmem>>)
    %c0_i32_258 = arith.constant 0 : i32
    %c0_i32_259 = arith.constant 0 : i32
    %c0_i32_260 = arith.constant 0 : i32
    %264 = tpu.memref_slice %arg2[%c0_i32_259, %c0_i32_260] : memref<20x32xf32, #tpu.memory_space<any>> -> memref<1x32xf32, #tpu.memory_space<any>>
    %c13_i32_261 = arith.constant 13 : i32
    %c0_i32_262 = arith.constant 0 : i32
    %265 = tpu.memref_slice %arg10[%c13_i32_261, %c0_i32_262] : memref<16x32xf32, #tpu.memory_space<vmem>> -> memref<1x32xf32, #tpu.memory_space<vmem>>
    %266 = tpu.memref_slice %arg12[%c0_i32_258] : memref<2x!tpu.dma_semaphore, #tpu.memory_space<semaphore_mem>> -> memref<1x!tpu.dma_semaphore, #tpu.memory_space<semaphore_mem>>
    %267 = tpu.memref_squeeze %266 : memref<1x!tpu.dma_semaphore, #tpu.memory_space<semaphore_mem>> -> memref<!tpu.dma_semaphore, #tpu.memory_space<semaphore_mem>>
    tpu.wait_dma2 semaphore(%267 : memref<!tpu.dma_semaphore, #tpu.memory_space<semaphore_mem>>) src(%264 : memref<1x32xf32, #tpu.memory_space<any>>) dst(%265 : memref<1x32xf32, #tpu.memory_space<vmem>>)
    %c1_i32_263 = arith.constant 1 : i32
    %c0_i32_264 = arith.constant 0 : i32
    %c0_i32_265 = arith.constant 0 : i32
    %268 = tpu.memref_slice %arg3[%c0_i32_264, %c0_i32_265] : memref<20x32xf32, #tpu.memory_space<any>> -> memref<1x32xf32, #tpu.memory_space<any>>
    %c13_i32_266 = arith.constant 13 : i32
    %c0_i32_267 = arith.constant 0 : i32
    %269 = tpu.memref_slice %arg11[%c13_i32_266, %c0_i32_267] : memref<16x32xf32, #tpu.memory_space<vmem>> -> memref<1x32xf32, #tpu.memory_space<vmem>>
    %270 = tpu.memref_slice %arg12[%c1_i32_263] : memref<2x!tpu.dma_semaphore, #tpu.memory_space<semaphore_mem>> -> memref<1x!tpu.dma_semaphore, #tpu.memory_space<semaphore_mem>>
    %271 = tpu.memref_squeeze %270 : memref<1x!tpu.dma_semaphore, #tpu.memory_space<semaphore_mem>> -> memref<!tpu.dma_semaphore, #tpu.memory_space<semaphore_mem>>
    tpu.wait_dma2 semaphore(%271 : memref<!tpu.dma_semaphore, #tpu.memory_space<semaphore_mem>>) src(%268 : memref<1x32xf32, #tpu.memory_space<any>>) dst(%269 : memref<1x32xf32, #tpu.memory_space<vmem>>)
    %c0_i32_268 = arith.constant 0 : i32
    %c0_i32_269 = arith.constant 0 : i32
    %c0_i32_270 = arith.constant 0 : i32
    %272 = tpu.memref_slice %arg2[%c0_i32_269, %c0_i32_270] : memref<20x32xf32, #tpu.memory_space<any>> -> memref<1x32xf32, #tpu.memory_space<any>>
    %c14_i32_271 = arith.constant 14 : i32
    %c0_i32_272 = arith.constant 0 : i32
    %273 = tpu.memref_slice %arg10[%c14_i32_271, %c0_i32_272] : memref<16x32xf32, #tpu.memory_space<vmem>> -> memref<1x32xf32, #tpu.memory_space<vmem>>
    %274 = tpu.memref_slice %arg12[%c0_i32_268] : memref<2x!tpu.dma_semaphore, #tpu.memory_space<semaphore_mem>> -> memref<1x!tpu.dma_semaphore, #tpu.memory_space<semaphore_mem>>
    %275 = tpu.memref_squeeze %274 : memref<1x!tpu.dma_semaphore, #tpu.memory_space<semaphore_mem>> -> memref<!tpu.dma_semaphore, #tpu.memory_space<semaphore_mem>>
    tpu.wait_dma2 semaphore(%275 : memref<!tpu.dma_semaphore, #tpu.memory_space<semaphore_mem>>) src(%272 : memref<1x32xf32, #tpu.memory_space<any>>) dst(%273 : memref<1x32xf32, #tpu.memory_space<vmem>>)
    %c1_i32_273 = arith.constant 1 : i32
    %c0_i32_274 = arith.constant 0 : i32
    %c0_i32_275 = arith.constant 0 : i32
    %276 = tpu.memref_slice %arg3[%c0_i32_274, %c0_i32_275] : memref<20x32xf32, #tpu.memory_space<any>> -> memref<1x32xf32, #tpu.memory_space<any>>
    %c14_i32_276 = arith.constant 14 : i32
    %c0_i32_277 = arith.constant 0 : i32
    %277 = tpu.memref_slice %arg11[%c14_i32_276, %c0_i32_277] : memref<16x32xf32, #tpu.memory_space<vmem>> -> memref<1x32xf32, #tpu.memory_space<vmem>>
    %278 = tpu.memref_slice %arg12[%c1_i32_273] : memref<2x!tpu.dma_semaphore, #tpu.memory_space<semaphore_mem>> -> memref<1x!tpu.dma_semaphore, #tpu.memory_space<semaphore_mem>>
    %279 = tpu.memref_squeeze %278 : memref<1x!tpu.dma_semaphore, #tpu.memory_space<semaphore_mem>> -> memref<!tpu.dma_semaphore, #tpu.memory_space<semaphore_mem>>
    tpu.wait_dma2 semaphore(%279 : memref<!tpu.dma_semaphore, #tpu.memory_space<semaphore_mem>>) src(%276 : memref<1x32xf32, #tpu.memory_space<any>>) dst(%277 : memref<1x32xf32, #tpu.memory_space<vmem>>)
    %c0_i32_278 = arith.constant 0 : i32
    %c0_i32_279 = arith.constant 0 : i32
    %c0_i32_280 = arith.constant 0 : i32
    %280 = tpu.memref_slice %arg2[%c0_i32_279, %c0_i32_280] : memref<20x32xf32, #tpu.memory_space<any>> -> memref<1x32xf32, #tpu.memory_space<any>>
    %c15_i32_281 = arith.constant 15 : i32
    %c0_i32_282 = arith.constant 0 : i32
    %281 = tpu.memref_slice %arg10[%c15_i32_281, %c0_i32_282] : memref<16x32xf32, #tpu.memory_space<vmem>> -> memref<1x32xf32, #tpu.memory_space<vmem>>
    %282 = tpu.memref_slice %arg12[%c0_i32_278] : memref<2x!tpu.dma_semaphore, #tpu.memory_space<semaphore_mem>> -> memref<1x!tpu.dma_semaphore, #tpu.memory_space<semaphore_mem>>
    %283 = tpu.memref_squeeze %282 : memref<1x!tpu.dma_semaphore, #tpu.memory_space<semaphore_mem>> -> memref<!tpu.dma_semaphore, #tpu.memory_space<semaphore_mem>>
    tpu.wait_dma2 semaphore(%283 : memref<!tpu.dma_semaphore, #tpu.memory_space<semaphore_mem>>) src(%280 : memref<1x32xf32, #tpu.memory_space<any>>) dst(%281 : memref<1x32xf32, #tpu.memory_space<vmem>>)
    %c1_i32_283 = arith.constant 1 : i32
    %c0_i32_284 = arith.constant 0 : i32
    %c0_i32_285 = arith.constant 0 : i32
    %284 = tpu.memref_slice %arg3[%c0_i32_284, %c0_i32_285] : memref<20x32xf32, #tpu.memory_space<any>> -> memref<1x32xf32, #tpu.memory_space<any>>
    %c15_i32_286 = arith.constant 15 : i32
    %c0_i32_287 = arith.constant 0 : i32
    %285 = tpu.memref_slice %arg11[%c15_i32_286, %c0_i32_287] : memref<16x32xf32, #tpu.memory_space<vmem>> -> memref<1x32xf32, #tpu.memory_space<vmem>>
    %286 = tpu.memref_slice %arg12[%c1_i32_283] : memref<2x!tpu.dma_semaphore, #tpu.memory_space<semaphore_mem>> -> memref<1x!tpu.dma_semaphore, #tpu.memory_space<semaphore_mem>>
    %287 = tpu.memref_squeeze %286 : memref<1x!tpu.dma_semaphore, #tpu.memory_space<semaphore_mem>> -> memref<!tpu.dma_semaphore, #tpu.memory_space<semaphore_mem>>
    tpu.wait_dma2 semaphore(%287 : memref<!tpu.dma_semaphore, #tpu.memory_space<semaphore_mem>>) src(%284 : memref<1x32xf32, #tpu.memory_space<any>>) dst(%285 : memref<1x32xf32, #tpu.memory_space<vmem>>)
    %c0_288 = arith.constant 0 : index
    %c0_289 = arith.constant 0 : index
    %288 = vector.load %arg10[%c0_288, %c0_289] : memref<16x32xf32, #tpu.memory_space<vmem>>, vector<16x32xf32>
    %c0_290 = arith.constant 0 : index
    %c0_291 = arith.constant 0 : index
    %289 = vector.load %arg4[%c0_290, %c0_291] : memref<32x32xf32, #tpu.memory_space<vmem>>, vector<32x32xf32>
    %cst = arith.constant dense<0.000000e+00> : vector<16x32xf32>
    %290 = tpu.matmul %288, %289, %cst {dimension_numbers = #tpu.dot_dimension_numbers<[1], [1], [0], [0], [0, 0, 1, 0], [], []>} : vector<16x32xf32>, vector<32x32xf32>, vector<16x32xf32> -> vector<16x32xf32>
    %c0_292 = arith.constant 0 : index
    %c0_293 = arith.constant 0 : index
    %291 = vector.load %arg5[%c0_292, %c0_293] : memref<1x32xf32, #tpu.memory_space<vmem>>, vector<1x32xf32>
    %292 = vector.broadcast %291 : vector<1x32xf32> to vector<16x32xf32>
    %293 = arith.addf %290, %292 : vector<16x32xf32>
    %cst_294 = arith.constant 3.000000e+00 : f32
    %294 = vector.broadcast %cst_294 : f32 to vector<16x32xf32>
    %295 = arith.mulf %294, %293 : vector<16x32xf32>
    %296 = math.tanh %295 : vector<16x32xf32>
    %c0_295 = arith.constant 0 : index
    %c0_296 = arith.constant 0 : index
    %297 = vector.load %arg11[%c0_295, %c0_296] : memref<16x32xf32, #tpu.memory_space<vmem>>, vector<16x32xf32>
    %c0_297 = arith.constant 0 : index
    %c0_298 = arith.constant 0 : index
    %298 = vector.load %arg6[%c0_297, %c0_298] : memref<32x32xf32, #tpu.memory_space<vmem>>, vector<32x32xf32>
    %cst_299 = arith.constant dense<0.000000e+00> : vector<16x32xf32>
    %299 = tpu.matmul %297, %298, %cst_299 {dimension_numbers = #tpu.dot_dimension_numbers<[1], [1], [0], [0], [0, 0, 1, 0], [], []>} : vector<16x32xf32>, vector<32x32xf32>, vector<16x32xf32> -> vector<16x32xf32>
    %c0_300 = arith.constant 0 : index
    %c0_301 = arith.constant 0 : index
    %300 = vector.load %arg7[%c0_300, %c0_301] : memref<1x32xf32, #tpu.memory_space<vmem>>, vector<1x32xf32>
    %301 = vector.broadcast %300 : vector<1x32xf32> to vector<16x32xf32>
    %302 = arith.addf %299, %301 : vector<16x32xf32>
    %cst_302 = arith.constant 3.000000e+00 : f32
    %303 = vector.broadcast %cst_302 : f32 to vector<16x32xf32>
    %304 = arith.mulf %303, %302 : vector<16x32xf32>
    %305 = math.tanh %304 : vector<16x32xf32>
    %cst_303 = arith.constant dense<0.000000e+00> : vector<16x16xf32>
    %306 = tpu.matmul %296, %305, %cst_303 {dimension_numbers = #tpu.dot_dimension_numbers<[1], [1], [0], [0], [0, 0, 1, 0], [], []>} : vector<16x32xf32>, vector<16x32xf32>, vector<16x16xf32> -> vector<16x16xf32>
    %307 = tpu.transpose %306, [1, 0] : vector<16x16xf32> -> vector<16x16xf32>
    %308 = arith.subf %306, %307 : vector<16x16xf32>
    %cst_304 = arith.constant 3.000000e+00 : f32
    %309 = vector.broadcast %cst_304 : f32 to vector<16x16xf32>
    %310 = arith.mulf %309, %308 : vector<16x16xf32>
    %311 = math.tanh %310 : vector<16x16xf32>
    %cst_305 = arith.constant 0.000000e+00 : f32
    %312 = vector.broadcast %cst_305 : f32 to vector<16x16xf32>
    %313 = arith.maximumf %311, %312 : vector<16x16xf32>
    %c0_306 = arith.constant 0 : index
    %c0_307 = arith.constant 0 : index
    %314 = vector.load %arg8[%c0_306, %c0_307] : memref<16x16xf32, #tpu.memory_space<vmem>>, vector<16x16xf32>
    %cst_308 = arith.constant 0.00999999977 : f32
    %315 = vector.broadcast %cst_308 : f32 to vector<16x16xf32>
    %316 = arith.mulf %314, %315 : vector<16x16xf32>
    %317 = arith.addf %313, %316 : vector<16x16xf32>
    %cst_309 = arith.constant dense<0xFF800000> : vector<16xf32>
    %318 = vector.multi_reduction <maximumf>, %317, %cst_309 [1] : vector<16x16xf32> to vector<16xf32>
    %319 = vector.shape_cast %318 : vector<16xf32> to vector<16x1xf32>
    %320 = vector.broadcast %319 : vector<16x1xf32> to vector<16x16xf32>
    %321 = arith.cmpf oge, %317, %320 : vector<16x16xf32>
    %cst_310 = arith.constant 0xFF800000 : f32
    %322 = vector.broadcast %cst_310 : f32 to vector<16x16xf32>
    %323 = arith.select %321, %322, %317 : vector<16x16xi1>, vector<16x16xf32>
    %cst_311 = arith.constant dense<0xFF800000> : vector<16xf32>
    %324 = vector.multi_reduction <maximumf>, %323, %cst_311 [1] : vector<16x16xf32> to vector<16xf32>
    %325 = vector.shape_cast %324 : vector<16xf32> to vector<16x1xf32>
    %326 = vector.broadcast %325 : vector<16x1xf32> to vector<16x16xf32>
    %327 = arith.cmpf oge, %323, %326 : vector<16x16xf32>
    %cst_312 = arith.constant 0xFF800000 : f32
    %328 = vector.broadcast %cst_312 : f32 to vector<16x16xf32>
    %329 = arith.select %327, %328, %323 : vector<16x16xi1>, vector<16x16xf32>
    %cst_313 = arith.constant dense<0xFF800000> : vector<16xf32>
    %330 = vector.multi_reduction <maximumf>, %329, %cst_313 [1] : vector<16x16xf32> to vector<16xf32>
    %331 = vector.shape_cast %330 : vector<16xf32> to vector<16x1xf32>
    %332 = vector.broadcast %331 : vector<16x1xf32> to vector<16x16xf32>
    %333 = arith.cmpf oge, %329, %332 : vector<16x16xf32>
    %cst_314 = arith.constant 0xFF800000 : f32
    %334 = vector.broadcast %cst_314 : f32 to vector<16x16xf32>
    %335 = arith.select %333, %334, %329 : vector<16x16xi1>, vector<16x16xf32>
    %cst_315 = arith.constant dense<0xFF800000> : vector<16xf32>
    %336 = vector.multi_reduction <maximumf>, %335, %cst_315 [1] : vector<16x16xf32> to vector<16xf32>
    %337 = vector.shape_cast %336 : vector<16xf32> to vector<16x1xf32>
    %338 = vector.broadcast %337 : vector<16x1xf32> to vector<16x16xf32>
    %339 = arith.cmpf oge, %317, %338 : vector<16x16xf32>
    %340 = arith.extui %339 : vector<16x16xi1> to vector<16x16xi32>
    %341 = arith.sitofp %340 : vector<16x16xi32> to vector<16x16xf32>
    %342 = arith.mulf %313, %341 : vector<16x16xf32>
    %c0_316 = arith.constant 0 : index
    %c0_317 = arith.constant 0 : index
    %343 = vector.load %arg9[%c0_316, %c0_317] : memref<16x16xf32, #tpu.memory_space<vmem>>, vector<16x16xf32>
    tpu.vector_store %arg9[%c0_316, %c0_317], %342 {strides = array<i32>} : memref<16x16xf32, #tpu.memory_space<vmem>>, vector<16x16xf32>,
    return
  }
  func.func @transform_2(%arg0: i32, %arg1: memref<16xi32, #tpu.memory_space<smem>>) -> (i32, i32) {
    %c0_i32 = arith.constant 0 : i32
    %c0_i32_0 = arith.constant 0 : i32
    %c0_i32_1 = arith.constant 0 : i32
    return %c0_i32, %c0_i32_0 : i32, i32
  }
  func.func @transform_3(%arg0: i32, %arg1: memref<16xi32, #tpu.memory_space<smem>>) -> (i32, i32) {
    %c0_i32 = arith.constant 0 : i32
    %c0_i32_0 = arith.constant 0 : i32
    %c0_i32_1 = arith.constant 0 : i32
    return %c0_i32, %c0_i32_0 : i32, i32
  }
  func.func @transform_4(%arg0: i32, %arg1: memref<16xi32, #tpu.memory_space<smem>>) -> (i32, i32) {
    %c0_i32 = arith.constant 0 : i32
    %c0_i32_0 = arith.constant 0 : i32
    %c0_i32_1 = arith.constant 0 : i32
    return %c0_i32, %c0_i32_0 : i32, i32
  }
  func.func @transform_5(%arg0: i32, %arg1: memref<16xi32, #tpu.memory_space<smem>>) -> (i32, i32) {
    %c0_i32 = arith.constant 0 : i32
    %c0_i32_0 = arith.constant 0 : i32
    %c0_i32_1 = arith.constant 0 : i32
    return %c0_i32, %c0_i32_0 : i32, i32
  }
  func.func @transform_6(%arg0: i32, %arg1: memref<16xi32, #tpu.memory_space<smem>>) -> (i32, i32) {
    %c0_i32 = arith.constant 0 : i32
    %c0_i32_0 = arith.constant 0 : i32
    %c0_i32_1 = arith.constant 0 : i32
    return %c0_i32, %c0_i32_0 : i32, i32
  }
  func.func @transform_7(%arg0: i32, %arg1: memref<16xi32, #tpu.memory_space<smem>>) -> (i32, i32) {
    %c0_i32 = arith.constant 0 : i32
    %c0_i32_0 = arith.constant 0 : i32
    %c0_i32_1 = arith.constant 0 : i32
    return %c0_i32, %c0_i32_0 : i32, i32
  }
}

</mosaic_0001>

<llo_original>
// kernel: tpu_custom_call.1
$region0: #{tpu_custom_call.1}
  #allocation0 [shape = 'u32[]', space=smem, size = 0x4, offset = 0x4, fixed_abs, tag = 'smem constant byte address 0x4 - core index']
  #allocation1 [shape = 'u32[144,128]{1,0:T(1,128)}', space=vmem, size = 0x12000, scoped, tag = 'internal scratch']
  #allocation2 [shape = 'f32[16,32]{1,0:T(8,128)}', space=vmem, size = 0x2000, scoped, tag = 'scratch operand']
  #allocation3 [shape = 'f32[16,32]{1,0:T(8,128)}', space=vmem, size = 0x2000, scoped, tag = 'scratch operand']
  #allocation4 [shape = 's32[2]{0}', space=sflag, size = 0x8, scoped, tag = 'scratch operand']
  #allocation5 [shape = 's32[1]{0}', space=sflag, size = 0x4, scoped, tag = 'scoped memory for tpu_custom_call.1']
  #allocation6 [shape = 'u8[512]{0}', space=smem, size = 0x200, scoped, tag = 'prefetched SMEM operand 0']
  #allocation14 [shape = 's32[]', space=sflag, size = 0x4, offset = 0, fixed_abs, tag = 'sflag constant byte address 0x0 - dummy sync flag']
  #allocation15 [shape = 's32[]', space=sflag, size = 0x4, offset = 0, fixed_abs, tag = 'sflag constant byte address 0x0 - dummy sync flag']
  #allocation16 [shape = 'u32[]', space=smem, size = 0x4, offset = 0x44, fixed_abs, tag = 'smem constant byte address 0x44 - assertion arg 0']
  #allocation17 [shape = 'u32[]', space=smem, size = 0x4, offset = 0x48, fixed_abs, tag = 'smem constant byte address 0x48 - assertion arg 1']
  #allocation18 [shape = 's32[]', space=sflag, size = 0x4, offset = 0, fixed_abs, tag = 'sflag constant byte address 0x0 - dummy sync flag']
  #allocation19 [shape = 's32[]', space=sflag, size = 0x4, offset = 0, fixed_abs, tag = 'sflag constant byte address 0x0 - dummy sync flag']
  #allocation20 [shape = 's32[]', space=sflag, size = 0x4, offset = 0, fixed_abs, tag = 'sflag constant byte address 0x0 - dummy sync flag']
  #allocation21 [shape = 's32[]', space=sflag, size = 0x4, offset = 0, fixed_abs, tag = 'sflag constant byte address 0x0 - dummy sync flag']
  #allocation22 [shape = 's32[]', space=sflag, size = 0x4, offset = 0, fixed_abs, tag = 'sflag constant byte address 0x0 - dummy sync flag']
  #allocation23 [shape = 's32[]', space=sflag, size = 0x4, offset = 0, fixed_abs, tag = 'sflag constant byte address 0x0 - dummy sync flag']
  #allocation24 [shape = 's32[]', space=sflag, size = 0x4, offset = 0, fixed_abs, tag = 'sflag constant byte address 0x0 - dummy sync flag']
  #allocation25 [shape = 's32[]', space=sflag, size = 0x4, offset = 0, fixed_abs, tag = 'sflag constant byte address 0x0 - dummy sync flag']
  #allocation26 [shape = 's32[]', space=sflag, size = 0x4, offset = 0, fixed_abs, tag = 'sflag constant byte address 0x0 - dummy sync flag']
  #allocation27 [shape = 's32[]', space=sflag, size = 0x4, offset = 0, fixed_abs, tag = 'sflag constant byte address 0x0 - dummy sync flag']
  #allocation28 [shape = 's32[]', space=sflag, size = 0x4, offset = 0, fixed_abs, tag = 'sflag constant byte address 0x0 - dummy sync flag']
  #allocation29 [shape = 's32[]', space=sflag, size = 0x4, offset = 0, fixed_abs, tag = 'sflag constant byte address 0x0 - dummy sync flag']
  #allocation30 [shape = 's32[]', space=sflag, size = 0x4, offset = 0, fixed_abs, tag = 'sflag constant byte address 0x0 - dummy sync flag']
  #allocation31 [shape = 's32[]', space=sflag, size = 0x4, offset = 0, fixed_abs, tag = 'sflag constant byte address 0x0 - dummy sync flag']
  #allocation32 [shape = 's32[]', space=sflag, size = 0x4, offset = 0, fixed_abs, tag = 'sflag constant byte address 0x0 - dummy sync flag']
  #allocation33 [shape = 's32[]', space=sflag, size = 0x4, offset = 0, fixed_abs, tag = 'sflag constant byte address 0x0 - dummy sync flag']
  #allocation34 [shape = 's32[]', space=sflag, size = 0x4, offset = 0, fixed_abs, tag = 'sflag constant byte address 0x0 - dummy sync flag']
  #allocation35 [shape = 's32[]', space=sflag, size = 0x4, offset = 0, fixed_abs, tag = 'sflag constant byte address 0x0 - dummy sync flag']
  #allocation36 [shape = 's32[]', space=sflag, size = 0x4, offset = 0, fixed_abs, tag = 'sflag constant byte address 0x0 - dummy sync flag']
  #allocation37 [shape = 's32[]', space=sflag, size = 0x4, offset = 0, fixed_abs, tag = 'sflag constant byte address 0x0 - dummy sync flag']
  #allocation38 [shape = 's32[]', space=sflag, size = 0x4, offset = 0, fixed_abs, tag = 'sflag constant byte address 0x0 - dummy sync flag']
  #allocation39 [shape = 's32[]', space=sflag, size = 0x4, offset = 0, fixed_abs, tag = 'sflag constant byte address 0x0 - dummy sync flag']
  #allocation40 [shape = 's32[]', space=sflag, size = 0x4, offset = 0, fixed_abs, tag = 'sflag constant byte address 0x0 - dummy sync flag']
  #allocation41 [shape = 's32[]', space=sflag, size = 0x4, offset = 0, fixed_abs, tag = 'sflag constant byte address 0x0 - dummy sync flag']
  #allocation42 [shape = 's32[]', space=sflag, size = 0x4, offset = 0, fixed_abs, tag = 'sflag constant byte address 0x0 - dummy sync flag']
  #allocation43 [shape = 's32[]', space=sflag, size = 0x4, offset = 0, fixed_abs, tag = 'sflag constant byte address 0x0 - dummy sync flag']
  #allocation44 [shape = 's32[]', space=sflag, size = 0x4, offset = 0, fixed_abs, tag = 'sflag constant byte address 0x0 - dummy sync flag']
  #allocation45 [shape = 's32[]', space=sflag, size = 0x4, offset = 0, fixed_abs, tag = 'sflag constant byte address 0x0 - dummy sync flag']
  #allocation46 [shape = 's32[]', space=sflag, size = 0x4, offset = 0, fixed_abs, tag = 'sflag constant byte address 0x0 - dummy sync flag']
  #allocation47 [shape = 's32[]', space=sflag, size = 0x4, offset = 0, fixed_abs, tag = 'sflag constant byte address 0x0 - dummy sync flag']
  #allocation48 [shape = 's32[]', space=sflag, size = 0x4, offset = 0, fixed_abs, tag = 'sflag constant byte address 0x0 - dummy sync flag']
  #allocation49 [shape = 's32[]', space=sflag, size = 0x4, offset = 0, fixed_abs, tag = 'sflag constant byte address 0x0 - dummy sync flag']
  #allocation50 [shape = 's32[]', space=sflag, size = 0x4, offset = 0, fixed_abs, tag = 'sflag constant byte address 0x0 - dummy sync flag']
  #allocation51 [shape = 's32[]', space=sflag, size = 0x4, offset = 0, fixed_abs, tag = 'sflag constant byte address 0x0 - dummy sync flag']
  #allocation52 [shape = 's32[]', space=sflag, size = 0x4, offset = 0, fixed_abs, tag = 'sflag constant byte address 0x0 - dummy sync flag']
  #allocation53 [shape = 's32[]', space=sflag, size = 0x4, offset = 0, fixed_abs, tag = 'sflag constant byte address 0x0 - dummy sync flag']
  #allocation54 [shape = 's32[]', space=sflag, size = 0x4, offset = 0, fixed_abs, tag = 'sflag constant byte address 0x0 - dummy sync flag']
  #allocation55 [shape = 's32[]', space=sflag, size = 0x4, offset = 0, fixed_abs, tag = 'sflag constant byte address 0x0 - dummy sync flag']
  #allocation56 [shape = 's32[]', space=sflag, size = 0x4, offset = 0, fixed_abs, tag = 'sflag constant byte address 0x0 - dummy sync flag']
  #allocation57 [shape = 's32[]', space=sflag, size = 0x4, offset = 0, fixed_abs, tag = 'sflag constant byte address 0x0 - dummy sync flag']
  #allocation58 [shape = 's32[]', space=sflag, size = 0x4, offset = 0, fixed_abs, tag = 'sflag constant byte address 0x0 - dummy sync flag']
  #allocation59 [shape = 's32[]', space=sflag, size = 0x4, offset = 0, fixed_abs, tag = 'sflag constant byte address 0x0 - dummy sync flag']
  #allocation60 [shape = 's32[]', space=sflag, size = 0x4, offset = 0, fixed_abs, tag = 'sflag constant byte address 0x0 - dummy sync flag']
  #allocation61 [shape = 's32[]', space=sflag, size = 0x4, offset = 0, fixed_abs, tag = 'sflag constant byte address 0x0 - dummy sync flag']
  #allocation62 [shape = 's32[]', space=sflag, size = 0x4, offset = 0, fixed_abs, tag = 'sflag constant byte address 0x0 - dummy sync flag']
  #allocation63 [shape = 's32[]', space=sflag, size = 0x4, offset = 0, fixed_abs, tag = 'sflag constant byte address 0x0 - dummy sync flag']
  #allocation64 [shape = 's32[]', space=sflag, size = 0x4, offset = 0, fixed_abs, tag = 'sflag constant byte address 0x0 - dummy sync flag']
  #allocation65 [shape = 's32[]', space=sflag, size = 0x4, offset = 0, fixed_abs, tag = 'sflag constant byte address 0x0 - dummy sync flag']
  #allocation66 [shape = 's32[]', space=sflag, size = 0x4, offset = 0, fixed_abs, tag = 'sflag constant byte address 0x0 - dummy sync flag']
  #allocation67 [shape = 's32[]', space=sflag, size = 0x4, offset = 0, fixed_abs, tag = 'sflag constant byte address 0x0 - dummy sync flag']
  #allocation68 [shape = 's32[]', space=sflag, size = 0x4, offset = 0, fixed_abs, tag = 'sflag constant byte address 0x0 - dummy sync flag']
  #allocation69 [shape = 's32[]', space=sflag, size = 0x4, offset = 0, fixed_abs, tag = 'sflag constant byte address 0x0 - dummy sync flag']
  #allocation70 [shape = 's32[]', space=sflag, size = 0x4, offset = 0, fixed_abs, tag = 'sflag constant byte address 0x0 - dummy sync flag']
  #allocation71 [shape = 's32[]', space=sflag, size = 0x4, offset = 0, fixed_abs, tag = 'sflag constant byte address 0x0 - dummy sync flag']
  #allocation72 [shape = 's32[]', space=sflag, size = 0x4, offset = 0, fixed_abs, tag = 'sflag constant byte address 0x0 - dummy sync flag']
  #allocation73 [shape = 's32[]', space=sflag, size = 0x4, offset = 0, fixed_abs, tag = 'sflag constant byte address 0x0 - dummy sync flag']
  #allocation74 [shape = 's32[]', space=sflag, size = 0x4, offset = 0, fixed_abs, tag = 'sflag constant byte address 0x0 - dummy sync flag']
  #allocation75 [shape = 's32[]', space=sflag, size = 0x4, offset = 0, fixed_abs, tag = 'sflag constant byte address 0x0 - dummy sync flag']
  #allocation76 [shape = 's32[]', space=sflag, size = 0x4, offset = 0, fixed_abs, tag = 'sflag constant byte address 0x0 - dummy sync flag']
  #allocation77 [shape = 's32[]', space=sflag, size = 0x4, offset = 0, fixed_abs, tag = 'sflag constant byte address 0x0 - dummy sync flag']
  #allocation78 [shape = 's32[]', space=sflag, size = 0x4, offset = 0, fixed_abs, tag = 'sflag constant byte address 0x0 - dummy sync flag']
  #allocation79 [shape = 's32[]', space=sflag, size = 0x4, offset = 0, fixed_abs, tag = 'sflag constant byte address 0x0 - dummy sync flag']
  %s0 = inlined_call_operand.hbm [shape: s32[16], index: 0, kind: input, shape index: {}]
  %s1 = inlined_call_operand.hbm [shape: f32[20,32], index: 1, kind: input, shape index: {}]
  %s2 = inlined_call_operand.hbm [shape: f32[20,32], index: 2, kind: input, shape index: {}]
  %s3 = inlined_call_operand.hbm [shape: f32[32,32], index: 3, kind: input, shape index: {}]
  %s4 = inlined_call_operand.vmem [shape: f32[1,32], index: 4, kind: input, shape index: {}]
  %s5 = inlined_call_operand.hbm [shape: f32[32,32], index: 5, kind: input, shape index: {}]
  %s6 = inlined_call_operand.vmem [shape: f32[1,32], index: 6, kind: input, shape index: {}]
  %s7 = inlined_call_operand.hbm [shape: f32[16,16], index: 7, kind: input, shape index: {}]
  %s8 = inlined_call_operand.hbm [shape: f32[16,16], index: 8, kind: output, shape index: {}]
  %s9 = sld [smem:[#allocation0]]
  $region170: #{tpu_custom_call.1} parent=0
    _
  %s11 = ssub.s32 1, %s9
  %s12 = scalar_select 0, %s11, %s9
  %14 = dma.hbm_to_smem %s0, 16, [#allocation6], [#allocation5]
  %15 = dma.done [#allocation5], 16
  %16 = sfence
  $region1: #{tpu_custom_call.1} parent=0
    #allocation7 [shape = 'u8[16384]{0}', space=vmem, size = 0x4000, scoped, tag = 'input window, operand 3, single buffered']
    #allocation8 [shape = 's32[1]{0}', space=sflag, size = 0x4, scoped, tag = 'scoped memory for tpu_custom_call.1']
    #allocation9 [shape = 's32[1]{0}', space=sflag, size = 0x4, scoped, tag = 'scoped memory for tpu_custom_call.1']
    #allocation10 [shape = 'u8[16384]{0}', space=vmem, size = 0x4000, scoped, tag = 'input window, operand 5, single buffered']
    #allocation11 [shape = 's32[1]{0}', space=sflag, size = 0x4, scoped, tag = 'scoped memory for tpu_custom_call.1']
    #allocation12 [shape = 'u8[8192]{0}', space=vmem, size = 0x2000, scoped, tag = 'input window, operand 7, single buffered']
    #allocation13 [shape = 'u8[8192]{0}', space=vmem, size = 0x2000, scoped, tag = 'output window, operand 0, single buffered']
    %17 = vsyncpa [#allocation8], 0
    %18 = vsyncpa [#allocation11], 0
    %19 = vsyncpa [#allocation9], 0
    // Predicated region
    $region2: #{tpu_custom_call.1} parent=1 // pred_check
      _
    $region3: #{tpu_custom_call.1} parent=1 // pred_check_branch
      %21 = sbr.rel (0) target = $region5
    $region4: #{tpu_custom_call.1} parent=1 // pred_region
      %s23 = ssub.s32 512, 512
      %24 = vsyncadd [#allocation8], %s23
      %s25 = sshll.u32 [#allocation7], 4
      %s26 = int_to_ptr.vmem [resolvable:$true] %s25
      %31 = dma.hbm_to_vmem [thread:$0]  %s3, 512, %s26, [#allocation8], 128, 128, 8
    $region5: #{tpu_custom_call.1} parent=1 // pred_fallthru
      _
    // Predicated region
    $region6: #{tpu_custom_call.1} parent=1 // pred_check
      _
    $region7: #{tpu_custom_call.1} parent=1 // pred_check_branch
      %33 = sbr.rel (0) target = $region9
    $region8: #{tpu_custom_call.1} parent=1 // pred_region
      _
    $region9: #{tpu_custom_call.1} parent=1 // pred_fallthru
      _
    // Predicated region
    $region10: #{tpu_custom_call.1} parent=1 // pred_check
      _
    $region11: #{tpu_custom_call.1} parent=1 // pred_check_branch
      %35 = sbr.rel (0) target = $region13
    $region12: #{tpu_custom_call.1} parent=1 // pred_region
      %s37 = ssub.s32 512, 512
      %38 = vsyncadd [#allocation11], %s37
      %s39 = sshll.u32 [#allocation10], 4
      %s40 = int_to_ptr.vmem [resolvable:$true] %s39
      %45 = dma.hbm_to_vmem [thread:$0]  %s5, 512, %s40, [#allocation11], 128, 128, 8
    $region13: #{tpu_custom_call.1} parent=1 // pred_fallthru
      _
    // Predicated region
    $region14: #{tpu_custom_call.1} parent=1 // pred_check
      _
    $region15: #{tpu_custom_call.1} parent=1 // pred_check_branch
      %47 = sbr.rel (0) target = $region17
    $region16: #{tpu_custom_call.1} parent=1 // pred_region
      _
    $region17: #{tpu_custom_call.1} parent=1 // pred_fallthru
      _
    // Predicated region
    $region18: #{tpu_custom_call.1} parent=1 // pred_check
      _
    $region19: #{tpu_custom_call.1} parent=1 // pred_check_branch
      %49 = sbr.rel (0) target = $region21
    $region20: #{tpu_custom_call.1} parent=1 // pred_region
      %s51 = ssub.s32 256, 256
      %52 = vsyncadd [#allocation11], %s51
      %s53 = sshll.u32 [#allocation12], 4
      %s54 = int_to_ptr.vmem [resolvable:$true] %s53
      %59 = dma.hbm_to_vmem [thread:$0]  %s7, 256, %s54, [#allocation11], 128, 128, 8
    $region21: #{tpu_custom_call.1} parent=1 // pred_fallthru
      _
    // Predicated region
    $region22: #{tpu_custom_call.1} parent=1 // pred_check
      _
    $region23: #{tpu_custom_call.1} parent=1 // pred_check_branch
      %61 = sbr.rel (0) target = $region25
    $region24: #{tpu_custom_call.1} parent=1 // pred_region
      %62 = dma.done [#allocation8], 512
    $region25: #{tpu_custom_call.1} parent=1 // pred_fallthru
      _
    // Predicated region
    $region26: #{tpu_custom_call.1} parent=1 // pred_check
      _
    $region27: #{tpu_custom_call.1} parent=1 // pred_check_branch
      %64 = sbr.rel (0) target = $region29
    $region28: #{tpu_custom_call.1} parent=1 // pred_region
      %65 = dma.done [#allocation11], 512
    $region29: #{tpu_custom_call.1} parent=1 // pred_fallthru
      _
    // Predicated region
    $region30: #{tpu_custom_call.1} parent=1 // pred_check
      _
    $region31: #{tpu_custom_call.1} parent=1 // pred_check_branch
      %67 = sbr.rel (0) target = $region33
    $region32: #{tpu_custom_call.1} parent=1 // pred_region
      %68 = dma.done [#allocation11], 256
    $region33: #{tpu_custom_call.1} parent=1 // pred_fallthru
      _
    %s69 = sld [smem:[#allocation6]]
    %s70 = smul.addr %s69, 16
    %s71 = scalar_lea.hbm %s1, %s70
    // Predicated region
    $region34: #{tpu_custom_call.1} parent=1 // pred_check
      _
    $region35: #{tpu_custom_call.1} parent=1 // pred_check_branch
      %73 = sbr.rel target = $region37
    $region36: #{tpu_custom_call.1} parent=1 // pred_region
      %74 = sst [smem:[#allocation16]] [#allocation15]
      %75 = sst [smem:[#allocation17]] [#allocation14]
    $region37: #{tpu_custom_call.1} parent=1 // pred_fallthru
      _
    %77 = shalt.err (0)
    %s79 = sshll.u32 [#allocation2], 4
    %s80 = int_to_ptr.vmem [resolvable:$true] %s79
    %82 = dma.hbm_to_vmem [thread:$0]  %s71, 16, %s80, [#allocation4]
    %s83 = sld [smem:[#allocation6]]
    %s84 = smul.addr %s83, 16
    %s85 = scalar_lea.hbm %s2, %s84
    %s86 = scalar_lea.sflag [#allocation4], 1
    // Predicated region
    $region38: #{tpu_custom_call.1} parent=1 // pred_check
      _
    $region39: #{tpu_custom_call.1} parent=1 // pred_check_branch
      %88 = sbr.rel target = $region41
    $region40: #{tpu_custom_call.1} parent=1 // pred_region
      %89 = sst [smem:[#allocation16]] [#allocation19]
      %90 = sst [smem:[#allocation17]] [#allocation18]
    $region41: #{tpu_custom_call.1} parent=1 // pred_fallthru
      _
    %92 = shalt.err (0)
    %s94 = sshll.u32 [#allocation3], 4
    %s95 = int_to_ptr.vmem [resolvable:$true] %s94
    %97 = dma.hbm_to_vmem [thread:$0]  %s85, 16, %s95, %s86
    %s98 = sld [smem:[#allocation6 + $0x1]]
    %s99 = smul.addr %s98, 16
    %s100 = scalar_lea.hbm %s1, %s99
    %s101 = scalar_lea.vmem [#allocation2], 1
    // Predicated region
    $region42: #{tpu_custom_call.1} parent=1 // pred_check
      _
    $region43: #{tpu_custom_call.1} parent=1 // pred_check_branch
      %103 = sbr.rel target = $region45
    $region44: #{tpu_custom_call.1} parent=1 // pred_region
      %104 = sst [smem:[#allocation16]] [#allocation21]
      %105 = sst [smem:[#allocation17]] [#allocation20]
    $region45: #{tpu_custom_call.1} parent=1 // pred_fallthru
      _
    %107 = shalt.err (0)
    %s109 = sshll.u32 %s101, 4
    %s110 = int_to_ptr.vmem [resolvable:$true] %s109
    %112 = dma.hbm_to_vmem [thread:$0]  %s100, 16, %s110, [#allocation4]
    %s113 = sld [smem:[#allocation6 + $0x1]]
    %s114 = smul.addr %s113, 16
    %s115 = scalar_lea.hbm %s2, %s114
    %s116 = scalar_lea.vmem [#allocation3], 1
    // Predicated region
    $region46: #{tpu_custom_call.1} parent=1 // pred_check
      _
    $region47: #{tpu_custom_call.1} parent=1 // pred_check_branch
      %118 = sbr.rel target = $region49
    $region48: #{tpu_custom_call.1} parent=1 // pred_region
      %119 = sst [smem:[#allocation16]] [#allocation23]
      %120 = sst [smem:[#allocation17]] [#allocation22]
    $region49: #{tpu_custom_call.1} parent=1 // pred_fallthru
      _
    %122 = shalt.err (0)
    %s124 = sshll.u32 %s116, 4
    %s125 = int_to_ptr.vmem [resolvable:$true] %s124
    %127 = dma.hbm_to_vmem [thread:$0]  %s115, 16, %s125, %s86
    %s128 = sld [smem:[#allocation6 + $0x2]]
    %s129 = smul.addr %s128, 16
    %s130 = scalar_lea.hbm %s1, %s129
    %s131 = scalar_lea.vmem [#allocation2], 2
    // Predicated region
    $region50: #{tpu_custom_call.1} parent=1 // pred_check
      _
    $region51: #{tpu_custom_call.1} parent=1 // pred_check_branch
      %133 = sbr.rel target = $region53
    $region52: #{tpu_custom_call.1} parent=1 // pred_region
      %134 = sst [smem:[#allocation16]] [#allocation25]
      %135 = sst [smem:[#allocation17]] [#allocation24]
    $region53: #{tpu_custom_call.1} parent=1 // pred_fallthru
      _
    %137 = shalt.err (0)
    %s139 = sshll.u32 %s131, 4
    %s140 = int_to_ptr.vmem [resolvable:$true] %s139
    %142 = dma.hbm_to_vmem [thread:$0]  %s130, 16, %s140, [#allocation4]
    %s143 = sld [smem:[#allocation6 + $0x2]]
    %s144 = smul.addr %s143, 16
    %s145 = scalar_lea.hbm %s2, %s144
    %s146 = scalar_lea.vmem [#allocation3], 2
    // Predicated region
    $region54: #{tpu_custom_call.1} parent=1 // pred_check
      _
    $region55: #{tpu_custom_call.1} parent=1 // pred_check_branch
      %148 = sbr.rel target = $region57
    $region56: #{tpu_custom_call.1} parent=1 // pred_region
      %149 = sst [smem:[#allocation16]] [#allocation27]
      %150 = sst [smem:[#allocation17]] [#allocation26]
    $region57: #{tpu_custom_call.1} parent=1 // pred_fallthru
      _
    %152 = shalt.err (0)
    %s154 = sshll.u32 %s146, 4
    %s155 = int_to_ptr.vmem [resolvable:$true] %s154
    %157 = dma.hbm_to_vmem [thread:$0]  %s145, 16, %s155, %s86
    %s158 = sld [smem:[#allocation6 + $0x3]]
    %s159 = smul.addr %s158, 16
    %s160 = scalar_lea.hbm %s1, %s159
    %s161 = scalar_lea.vmem [#allocation2], 3
    // Predicated region
    $region58: #{tpu_custom_call.1} parent=1 // pred_check
      _
    $region59: #{tpu_custom_call.1} parent=1 // pred_check_branch
      %163 = sbr.rel target = $region61
    $region60: #{tpu_custom_call.1} parent=1 // pred_region
      %164 = sst [smem:[#allocation16]] [#allocation29]
      %165 = sst [smem:[#allocation17]] [#allocation28]
    $region61: #{tpu_custom_call.1} parent=1 // pred_fallthru
      _
    %167 = shalt.err (0)
    %s169 = sshll.u32 %s161, 4
    %s170 = int_to_ptr.vmem [resolvable:$true] %s169
    %172 = dma.hbm_to_vmem [thread:$0]  %s160, 16, %s170, [#allocation4]
    %s173 = sld [smem:[#allocation6 + $0x3]]
    %s174 = smul.addr %s173, 16
    %s175 = scalar_lea.hbm %s2, %s174
    %s176 = scalar_lea.vmem [#allocation3], 3
    // Predicated region
    $region62: #{tpu_custom_call.1} parent=1 // pred_check
      _
    $region63: #{tpu_custom_call.1} parent=1 // pred_check_branch
      %178 = sbr.rel target = $region65
    $region64: #{tpu_custom_call.1} parent=1 // pred_region
      %179 = sst [smem:[#allocation16]] [#allocation31]
      %180 = sst [smem:[#allocation17]] [#allocation30]
    $region65: #{tpu_custom_call.1} parent=1 // pred_fallthru
      _
    %182 = shalt.err (0)
    %s184 = sshll.u32 %s176, 4
    %s185 = int_to_ptr.vmem [resolvable:$true] %s184
    %187 = dma.hbm_to_vmem [thread:$0]  %s175, 16, %s185, %s86
    %s188 = sld [smem:[#allocation6 + $0x4]]
    %s189 = smul.addr %s188, 16
    %s190 = scalar_lea.hbm %s1, %s189
    %s191 = scalar_lea.vmem [#allocation2], 4
    // Predicated region
    $region66: #{tpu_custom_call.1} parent=1 // pred_check
      _
    $region67: #{tpu_custom_call.1} parent=1 // pred_check_branch
      %193 = sbr.rel target = $region69
    $region68: #{tpu_custom_call.1} parent=1 // pred_region
      %194 = sst [smem:[#allocation16]] [#allocation33]
      %195 = sst [smem:[#allocation17]] [#allocation32]
    $region69: #{tpu_custom_call.1} parent=1 // pred_fallthru
      _
    %197 = shalt.err (0)
    %s199 = sshll.u32 %s191, 4
    %s200 = int_to_ptr.vmem [resolvable:$true] %s199
    %202 = dma.hbm_to_vmem [thread:$0]  %s190, 16, %s200, [#allocation4]
    %s203 = sld [smem:[#allocation6 + $0x4]]
    %s204 = smul.addr %s203, 16
    %s205 = scalar_lea.hbm %s2, %s204
    %s206 = scalar_lea.vmem [#allocation3], 4
    // Predicated region
    $region70: #{tpu_custom_call.1} parent=1 // pred_check
      _
    $region71: #{tpu_custom_call.1} parent=1 // pred_check_branch
      %208 = sbr.rel target = $region73
    $region72: #{tpu_custom_call.1} parent=1 // pred_region
      %209 = sst [smem:[#allocation16]] [#allocation35]
      %210 = sst [smem:[#allocation17]] [#allocation34]
    $region73: #{tpu_custom_call.1} parent=1 // pred_fallthru
      _
    %212 = shalt.err (0)
    %s214 = sshll.u32 %s206, 4
    %s215 = int_to_ptr.vmem [resolvable:$true] %s214
    %217 = dma.hbm_to_vmem [thread:$0]  %s205, 16, %s215, %s86
    %s218 = sld [smem:[#allocation6 + $0x5]]
    %s219 = smul.addr %s218, 16
    %s220 = scalar_lea.hbm %s1, %s219
    %s221 = scalar_lea.vmem [#allocation2], 5
    // Predicated region
    $region74: #{tpu_custom_call.1} parent=1 // pred_check
      _
    $region75: #{tpu_custom_call.1} parent=1 // pred_check_branch
      %223 = sbr.rel target = $region77
    $region76: #{tpu_custom_call.1} parent=1 // pred_region
      %224 = sst [smem:[#allocation16]] [#allocation37]
      %225 = sst [smem:[#allocation17]] [#allocation36]
    $region77: #{tpu_custom_call.1} parent=1 // pred_fallthru
      _
    %227 = shalt.err (0)
    %s229 = sshll.u32 %s221, 4
    %s230 = int_to_ptr.vmem [resolvable:$true] %s229
    %232 = dma.hbm_to_vmem [thread:$0]  %s220, 16, %s230, [#allocation4]
    %s233 = sld [smem:[#allocation6 + $0x5]]
    %s234 = smul.addr %s233, 16
    %s235 = scalar_lea.hbm %s2, %s234
    %s236 = scalar_lea.vmem [#allocation3], 5
    // Predicated region
    $region78: #{tpu_custom_call.1} parent=1 // pred_check
      _
    $region79: #{tpu_custom_call.1} parent=1 // pred_check_branch
      %238 = sbr.rel target = $region81
    $region80: #{tpu_custom_call.1} parent=1 // pred_region
      %239 = sst [smem:[#allocation16]] [#allocation39]
      %240 = sst [smem:[#allocation17]] [#allocation38]
    $region81: #{tpu_custom_call.1} parent=1 // pred_fallthru
      _
    %242 = shalt.err (0)
    %s244 = sshll.u32 %s236, 4
    %s245 = int_to_ptr.vmem [resolvable:$true] %s244
    %247 = dma.hbm_to_vmem [thread:$0]  %s235, 16, %s245, %s86
    %s248 = sld [smem:[#allocation6 + $0x6]]
    %s249 = smul.addr %s248, 16
    %s250 = scalar_lea.hbm %s1, %s249
    %s251 = scalar_lea.vmem [#allocation2], 6
    // Predicated region
    $region82: #{tpu_custom_call.1} parent=1 // pred_check
      _
    $region83: #{tpu_custom_call.1} parent=1 // pred_check_branch
      %253 = sbr.rel target = $region85
    $region84: #{tpu_custom_call.1} parent=1 // pred_region
      %254 = sst [smem:[#allocation16]] [#allocation41]
      %255 = sst [smem:[#allocation17]] [#allocation40]
    $region85: #{tpu_custom_call.1} parent=1 // pred_fallthru
      _
    %257 = shalt.err (0)
    %s259 = sshll.u32 %s251, 4
    %s260 = int_to_ptr.vmem [resolvable:$true] %s259
    %262 = dma.hbm_to_vmem [thread:$0]  %s250, 16, %s260, [#allocation4]
    %s263 = sld [smem:[#allocation6 + $0x6]]
    %s264 = smul.addr %s263, 16
    %s265 = scalar_lea.hbm %s2, %s264
    %s266 = scalar_lea.vmem [#allocation3], 6
    // Predicated region
    $region86: #{tpu_custom_call.1} parent=1 // pred_check
      _
    $region87: #{tpu_custom_call.1} parent=1 // pred_check_branch
      %268 = sbr.rel target = $region89
    $region88: #{tpu_custom_call.1} parent=1 // pred_region
      %269 = sst [smem:[#allocation16]] [#allocation43]
      %270 = sst [smem:[#allocation17]] [#allocation42]
    $region89: #{tpu_custom_call.1} parent=1 // pred_fallthru
      _
    %272 = shalt.err (0)
    %s274 = sshll.u32 %s266, 4
    %s275 = int_to_ptr.vmem [resolvable:$true] %s274
    %277 = dma.hbm_to_vmem [thread:$0]  %s265, 16, %s275, %s86
    %s278 = sld [smem:[#allocation6 + $0x7]]
    %s279 = smul.addr %s278, 16
    %s280 = scalar_lea.hbm %s1, %s279
    %s281 = scalar_lea.vmem [#allocation2], 7
    // Predicated region
    $region90: #{tpu_custom_call.1} parent=1 // pred_check
      _
    $region91: #{tpu_custom_call.1} parent=1 // pred_check_branch
      %283 = sbr.rel target = $region93
    $region92: #{tpu_custom_call.1} parent=1 // pred_region
      %284 = sst [smem:[#allocation16]] [#allocation45]
      %285 = sst [smem:[#allocation17]] [#allocation44]
    $region93: #{tpu_custom_call.1} parent=1 // pred_fallthru
      _
    %287 = shalt.err (0)
    %s289 = sshll.u32 %s281, 4
    %s290 = int_to_ptr.vmem [resolvable:$true] %s289
    %292 = dma.hbm_to_vmem [thread:$0]  %s280, 16, %s290, [#allocation4]
    %s293 = sld [smem:[#allocation6 + $0x7]]
    %s294 = smul.addr %s293, 16
    %s295 = scalar_lea.hbm %s2, %s294
    %s296 = scalar_lea.vmem [#allocation3], 7
    // Predicated region
    $region94: #{tpu_custom_call.1} parent=1 // pred_check
      _
    $region95: #{tpu_custom_call.1} parent=1 // pred_check_branch
      %298 = sbr.rel target = $region97
    $region96: #{tpu_custom_call.1} parent=1 // pred_region
      %299 = sst [smem:[#allocation16]] [#allocation47]
      %300 = sst [smem:[#allocation17]] [#allocation46]
    $region97: #{tpu_custom_call.1} parent=1 // pred_fallthru
      _
    %302 = shalt.err (0)
    %s304 = sshll.u32 %s296, 4
    %s305 = int_to_ptr.vmem [resolvable:$true] %s304
    %307 = dma.hbm_to_vmem [thread:$0]  %s295, 16, %s305, %s86
    %s308 = sld [smem:[#allocation6 + $0x8]]
    %s309 = smul.addr %s308, 16
    %s310 = scalar_lea.hbm %s1, %s309
    %s311 = scalar_lea.vmem [#allocation2], 8
    // Predicated region
    $region98: #{tpu_custom_call.1} parent=1 // pred_check
      _
    $region99: #{tpu_custom_call.1} parent=1 // pred_check_branch
      %313 = sbr.rel target = $region101
    $region100: #{tpu_custom_call.1} parent=1 // pred_region
      %314 = sst [smem:[#allocation16]] [#allocation49]
      %315 = sst [smem:[#allocation17]] [#allocation48]
    $region101: #{tpu_custom_call.1} parent=1 // pred_fallthru
      _
    %317 = shalt.err (0)
    %s319 = sshll.u32 %s311, 4
    %s320 = int_to_ptr.vmem [resolvable:$true] %s319
    %322 = dma.hbm_to_vmem [thread:$0]  %s310, 16, %s320, [#allocation4]
    %s323 = sld [smem:[#allocation6 + $0x8]]
    %s324 = smul.addr %s323, 16
    %s325 = scalar_lea.hbm %s2, %s324
    %s326 = scalar_lea.vmem [#allocation3], 8
    // Predicated region
    $region102: #{tpu_custom_call.1} parent=1 // pred_check
      _
    $region103: #{tpu_custom_call.1} parent=1 // pred_check_branch
      %328 = sbr.rel target = $region105
    $region104: #{tpu_custom_call.1} parent=1 // pred_region
      %329 = sst [smem:[#allocation16]] [#allocation51]
      %330 = sst [smem:[#allocation17]] [#allocation50]
    $region105: #{tpu_custom_call.1} parent=1 // pred_fallthru
      _
    %332 = shalt.err (0)
    %s334 = sshll.u32 %s326, 4
    %s335 = int_to_ptr.vmem [resolvable:$true] %s334
    %337 = dma.hbm_to_vmem [thread:$0]  %s325, 16, %s335, %s86
    %s338 = sld [smem:[#allocation6 + $0x9]]
    %s339 = smul.addr %s338, 16
    %s340 = scalar_lea.hbm %s1, %s339
    %s341 = scalar_lea.vmem [#allocation2], 9
    // Predicated region
    $region106: #{tpu_custom_call.1} parent=1 // pred_check
      _
    $region107: #{tpu_custom_call.1} parent=1 // pred_check_branch
      %343 = sbr.rel target = $region109
    $region108: #{tpu_custom_call.1} parent=1 // pred_region
      %344 = sst [smem:[#allocation16]] [#allocation53]
      %345 = sst [smem:[#allocation17]] [#allocation52]
    $region109: #{tpu_custom_call.1} parent=1 // pred_fallthru
      _
    %347 = shalt.err (0)
    %s349 = sshll.u32 %s341, 4
    %s350 = int_to_ptr.vmem [resolvable:$true] %s349
    %352 = dma.hbm_to_vmem [thread:$0]  %s340, 16, %s350, [#allocation4]
    %s353 = sld [smem:[#allocation6 + $0x9]]
    %s354 = smul.addr %s353, 16
    %s355 = scalar_lea.hbm %s2, %s354
    %s356 = scalar_lea.vmem [#allocation3], 9
    // Predicated region
    $region110: #{tpu_custom_call.1} parent=1 // pred_check
      _
    $region111: #{tpu_custom_call.1} parent=1 // pred_check_branch
      %358 = sbr.rel target = $region113
    $region112: #{tpu_custom_call.1} parent=1 // pred_region
      %359 = sst [smem:[#allocation16]] [#allocation55]
      %360 = sst [smem:[#allocation17]] [#allocation54]
    $region113: #{tpu_custom_call.1} parent=1 // pred_fallthru
      _
    %362 = shalt.err (0)
    %s364 = sshll.u32 %s356, 4
    %s365 = int_to_ptr.vmem [resolvable:$true] %s364
    %367 = dma.hbm_to_vmem [thread:$0]  %s355, 16, %s365, %s86
    %s368 = sld [smem:[#allocation6 + $0xa]]
    %s369 = smul.addr %s368, 16
    %s370 = scalar_lea.hbm %s1, %s369
    %s371 = scalar_lea.vmem [#allocation2], 10
    // Predicated region
    $region114: #{tpu_custom_call.1} parent=1 // pred_check
      _
    $region115: #{tpu_custom_call.1} parent=1 // pred_check_branch
      %373 = sbr.rel target = $region117
    $region116: #{tpu_custom_call.1} parent=1 // pred_region
      %374 = sst [smem:[#allocation16]] [#allocation57]
      %375 = sst [smem:[#allocation17]] [#allocation56]
    $region117: #{tpu_custom_call.1} parent=1 // pred_fallthru
      _
    %377 = shalt.err (0)
    %s379 = sshll.u32 %s371, 4
    %s380 = int_to_ptr.vmem [resolvable:$true] %s379
    %382 = dma.hbm_to_vmem [thread:$0]  %s370, 16, %s380, [#allocation4]
    %s383 = sld [smem:[#allocation6 + $0xa]]
    %s384 = smul.addr %s383, 16
    %s385 = scalar_lea.hbm %s2, %s384
    %s386 = scalar_lea.vmem [#allocation3], 10
    // Predicated region
    $region118: #{tpu_custom_call.1} parent=1 // pred_check
      _
    $region119: #{tpu_custom_call.1} parent=1 // pred_check_branch
      %388 = sbr.rel target = $region121
    $region120: #{tpu_custom_call.1} parent=1 // pred_region
      %389 = sst [smem:[#allocation16]] [#allocation59]
      %390 = sst [smem:[#allocation17]] [#allocation58]
    $region121: #{tpu_custom_call.1} parent=1 // pred_fallthru
      _
    %392 = shalt.err (0)
    %s394 = sshll.u32 %s386, 4
    %s395 = int_to_ptr.vmem [resolvable:$true] %s394
    %397 = dma.hbm_to_vmem [thread:$0]  %s385, 16, %s395, %s86
    %s398 = sld [smem:[#allocation6 + $0xb]]
    %s399 = smul.addr %s398, 16
    %s400 = scalar_lea.hbm %s1, %s399
    %s401 = scalar_lea.vmem [#allocation2], 11
    // Predicated region
    $region122: #{tpu_custom_call.1} parent=1 // pred_check
      _
    $region123: #{tpu_custom_call.1} parent=1 // pred_check_branch
      %403 = sbr.rel target = $region125
    $region124: #{tpu_custom_call.1} parent=1 // pred_region
      %404 = sst [smem:[#allocation16]] [#allocation61]
      %405 = sst [smem:[#allocation17]] [#allocation60]
    $region125: #{tpu_custom_call.1} parent=1 // pred_fallthru
      _
    %407 = shalt.err (0)
    %s409 = sshll.u32 %s401, 4
    %s410 = int_to_ptr.vmem [resolvable:$true] %s409
    %412 = dma.hbm_to_vmem [thread:$0]  %s400, 16, %s410, [#allocation4]
    %s413 = sld [smem:[#allocation6 + $0xb]]
    %s414 = smul.addr %s413, 16
    %s415 = scalar_lea.hbm %s2, %s414
    %s416 = scalar_lea.vmem [#allocation3], 11
    // Predicated region
    $region126: #{tpu_custom_call.1} parent=1 // pred_check
      _
    $region127: #{tpu_custom_call.1} parent=1 // pred_check_branch
      %418 = sbr.rel target = $region129
    $region128: #{tpu_custom_call.1} parent=1 // pred_region
      %419 = sst [smem:[#allocation16]] [#allocation63]
      %420 = sst [smem:[#allocation17]] [#allocation62]
    $region129: #{tpu_custom_call.1} parent=1 // pred_fallthru
      _
    %422 = shalt.err (0)
    %s424 = sshll.u32 %s416, 4
    %s425 = int_to_ptr.vmem [resolvable:$true] %s424
    %427 = dma.hbm_to_vmem [thread:$0]  %s415, 16, %s425, %s86
    %s428 = sld [smem:[#allocation6 + $0xc]]
    %s429 = smul.addr %s428, 16
    %s430 = scalar_lea.hbm %s1, %s429
    %s431 = scalar_lea.vmem [#allocation2], 12
    // Predicated region
    $region130: #{tpu_custom_call.1} parent=1 // pred_check
      _
    $region131: #{tpu_custom_call.1} parent=1 // pred_check_branch
      %433 = sbr.rel target = $region133
    $region132: #{tpu_custom_call.1} parent=1 // pred_region
      %434 = sst [smem:[#allocation16]] [#allocation65]
      %435 = sst [smem:[#allocation17]] [#allocation64]
    $region133: #{tpu_custom_call.1} parent=1 // pred_fallthru
      _
    %437 = shalt.err (0)
    %s439 = sshll.u32 %s431, 4
    %s440 = int_to_ptr.vmem [resolvable:$true] %s439
    %442 = dma.hbm_to_vmem [thread:$0]  %s430, 16, %s440, [#allocation4]
    %s443 = sld [smem:[#allocation6 + $0xc]]
    %s444 = smul.addr %s443, 16
    %s445 = scalar_lea.hbm %s2, %s444
    %s446 = scalar_lea.vmem [#allocation3], 12
    // Predicated region
    $region134: #{tpu_custom_call.1} parent=1 // pred_check
      _
    $region135: #{tpu_custom_call.1} parent=1 // pred_check_branch
      %448 = sbr.rel target = $region137
    $region136: #{tpu_custom_call.1} parent=1 // pred_region
      %449 = sst [smem:[#allocation16]] [#allocation67]
      %450 = sst [smem:[#allocation17]] [#allocation66]
    $region137: #{tpu_custom_call.1} parent=1 // pred_fallthru
      _
    %452 = shalt.err (0)
    %s454 = sshll.u32 %s446, 4
    %s455 = int_to_ptr.vmem [resolvable:$true] %s454
    %457 = dma.hbm_to_vmem [thread:$0]  %s445, 16, %s455, %s86
    %s458 = sld [smem:[#allocation6 + $0xd]]
    %s459 = smul.addr %s458, 16
    %s460 = scalar_lea.hbm %s1, %s459
    %s461 = scalar_lea.vmem [#allocation2], 13
    // Predicated region
    $region138: #{tpu_custom_call.1} parent=1 // pred_check
      _
    $region139: #{tpu_custom_call.1} parent=1 // pred_check_branch
      %463 = sbr.rel target = $region141
    $region140: #{tpu_custom_call.1} parent=1 // pred_region
      %464 = sst [smem:[#allocation16]] [#allocation69]
      %465 = sst [smem:[#allocation17]] [#allocation68]
    $region141: #{tpu_custom_call.1} parent=1 // pred_fallthru
      _
    %467 = shalt.err (0)
    %s469 = sshll.u32 %s461, 4
    %s470 = int_to_ptr.vmem [resolvable:$true] %s469
    %472 = dma.hbm_to_vmem [thread:$0]  %s460, 16, %s470, [#allocation4]
    %s473 = sld [smem:[#allocation6 + $0xd]]
    %s474 = smul.addr %s473, 16
    %s475 = scalar_lea.hbm %s2, %s474
    %s476 = scalar_lea.vmem [#allocation3], 13
    // Predicated region
    $region142: #{tpu_custom_call.1} parent=1 // pred_check
      _
    $region143: #{tpu_custom_call.1} parent=1 // pred_check_branch
      %478 = sbr.rel target = $region145
    $region144: #{tpu_custom_call.1} parent=1 // pred_region
      %479 = sst [smem:[#allocation16]] [#allocation71]
      %480 = sst [smem:[#allocation17]] [#allocation70]
    $region145: #{tpu_custom_call.1} parent=1 // pred_fallthru
      _
    %482 = shalt.err (0)
    %s484 = sshll.u32 %s476, 4
    %s485 = int_to_ptr.vmem [resolvable:$true] %s484
    %487 = dma.hbm_to_vmem [thread:$0]  %s475, 16, %s485, %s86
    %s488 = sld [smem:[#allocation6 + $0xe]]
    %s489 = smul.addr %s488, 16
    %s490 = scalar_lea.hbm %s1, %s489
    %s491 = scalar_lea.vmem [#allocation2], 14
    // Predicated region
    $region146: #{tpu_custom_call.1} parent=1 // pred_check
      _
    $region147: #{tpu_custom_call.1} parent=1 // pred_check_branch
      %493 = sbr.rel target = $region149
    $region148: #{tpu_custom_call.1} parent=1 // pred_region
      %494 = sst [smem:[#allocation16]] [#allocation73]
      %495 = sst [smem:[#allocation17]] [#allocation72]
    $region149: #{tpu_custom_call.1} parent=1 // pred_fallthru
      _
    %497 = shalt.err (0)
    %s499 = sshll.u32 %s491, 4
    %s500 = int_to_ptr.vmem [resolvable:$true] %s499
    %502 = dma.hbm_to_vmem [thread:$0]  %s490, 16, %s500, [#allocation4]
    %s503 = sld [smem:[#allocation6 + $0xe]]
    %s504 = smul.addr %s503, 16
    %s505 = scalar_lea.hbm %s2, %s504
    %s506 = scalar_lea.vmem [#allocation3], 14
    // Predicated region
    $region150: #{tpu_custom_call.1} parent=1 // pred_check
      _
    $region151: #{tpu_custom_call.1} parent=1 // pred_check_branch
      %508 = sbr.rel target = $region153
    $region152: #{tpu_custom_call.1} parent=1 // pred_region
      %509 = sst [smem:[#allocation16]] [#allocation75]
      %510 = sst [smem:[#allocation17]] [#allocation74]
    $region153: #{tpu_custom_call.1} parent=1 // pred_fallthru
      _
    %512 = shalt.err (0)
    %s514 = sshll.u32 %s506, 4
    %s515 = int_to_ptr.vmem [resolvable:$true] %s514
    %517 = dma.hbm_to_vmem [thread:$0]  %s505, 16, %s515, %s86
    %s518 = sld [smem:[#allocation6 + $0xf]]
    %s519 = smul.addr %s518, 16
    %s520 = scalar_lea.hbm %s1, %s519
    %s521 = scalar_lea.vmem [#allocation2], 15
    // Predicated region
    $region154: #{tpu_custom_call.1} parent=1 // pred_check
      _
    $region155: #{tpu_custom_call.1} parent=1 // pred_check_branch
      %523 = sbr.rel target = $region157
    $region156: #{tpu_custom_call.1} parent=1 // pred_region
      %524 = sst [smem:[#allocation16]] [#allocation77]
      %525 = sst [smem:[#allocation17]] [#allocation76]
    $region157: #{tpu_custom_call.1} parent=1 // pred_fallthru
      _
    %527 = shalt.err (0)
    %s529 = sshll.u32 %s521, 4
    %s530 = int_to_ptr.vmem [resolvable:$true] %s529
    %532 = dma.hbm_to_vmem [thread:$0]  %s520, 16, %s530, [#allocation4]
    %s533 = sld [smem:[#allocation6 + $0xf]]
    %s534 = smul.addr %s533, 16
    %s535 = scalar_lea.hbm %s2, %s534
    %s536 = scalar_lea.vmem [#allocation3], 15
    // Predicated region
    $region158: #{tpu_custom_call.1} parent=1 // pred_check
      _
    $region159: #{tpu_custom_call.1} parent=1 // pred_check_branch
      %538 = sbr.rel target = $region161
    $region160: #{tpu_custom_call.1} parent=1 // pred_region
      %539 = sst [smem:[#allocation16]] [#allocation79]
      %540 = sst [smem:[#allocation17]] [#allocation78]
    $region161: #{tpu_custom_call.1} parent=1 // pred_fallthru
      _
    %542 = shalt.err (0)
    %s544 = sshll.u32 %s536, 4
    %s545 = int_to_ptr.vmem [resolvable:$true] %s544
    %547 = dma.hbm_to_vmem [thread:$0]  %s535, 16, %s545, %s86
    %s548 = smul.u32 1, 1
    %s549 = sshll.u32 %s548, 4
    %550 = dma.done [#allocation4], %s549
    %s551 = sshll.u32 %s548, 4
    %552 = dma.done %s86, %s551
    %s553 = sshll.u32 %s548, 4
    %554 = dma.done [#allocation4], %s553
    %s555 = sshll.u32 %s548, 4
    %556 = dma.done %s86, %s555
    %s557 = sshll.u32 %s548, 4
    %558 = dma.done [#allocation4], %s557
    %s559 = sshll.u32 %s548, 4
    %560 = dma.done %s86, %s559
    %s561 = sshll.u32 %s548, 4
    %562 = dma.done [#allocation4], %s561
    %s563 = sshll.u32 %s548, 4
    %564 = dma.done %s86, %s563
    %s565 = sshll.u32 %s548, 4
    %566 = dma.done [#allocation4], %s565
    %s567 = sshll.u32 %s548, 4
    %568 = dma.done %s86, %s567
    %s569 = sshll.u32 %s548, 4
    %570 = dma.done [#allocation4], %s569
    %s571 = sshll.u32 %s548, 4
    %572 = dma.done %s86, %s571
    %s573 = sshll.u32 %s548, 4
    %574 = dma.done [#allocation4], %s573
    %s575 = sshll.u32 %s548, 4
    %576 = dma.done %s86, %s575
    %s577 = sshll.u32 %s548, 4
    %578 = dma.done [#allocation4], %s577
    %s579 = sshll.u32 %s548, 4
    %580 = dma.done %s86, %s579
    %s581 = sshll.u32 %s548, 4
    %582 = dma.done [#allocation4], %s581
    %s583 = sshll.u32 %s548, 4
    %584 = dma.done %s86, %s583
    %s585 = sshll.u32 %s548, 4
    %586 = dma.done [#allocation4], %s585
    %s587 = sshll.u32 %s548, 4
    %588 = dma.done %s86, %s587
    %s589 = sshll.u32 %s548, 4
    %590 = dma.done [#allocation4], %s589
    %s591 = sshll.u32 %s548, 4
    %592 = dma.done %s86, %s591
    %s593 = sshll.u32 %s548, 4
    %594 = dma.done [#allocation4], %s593
    %s595 = sshll.u32 %s548, 4
    %596 = dma.done %s86, %s595
    %s597 = sshll.u32 %s548, 4
    %598 = dma.done [#allocation4], %s597
    %s599 = sshll.u32 %s548, 4
    %600 = dma.done %s86, %s599
    %s601 = sshll.u32 %s548, 4
    %602 = dma.done [#allocation4], %s601
    %s603 = sshll.u32 %s548, 4
    %604 = dma.done %s86, %s603
    %s605 = sshll.u32 %s548, 4
    %606 = dma.done [#allocation4], %s605
    %s607 = sshll.u32 %s548, 4
    %608 = dma.done %s86, %s607
    %s609 = sshll.u32 %s548, 4
    %610 = dma.done [#allocation4], %s609
    %s611 = sshll.u32 %s548, 4
    %612 = dma.done %s86, %s611
    %v613 = vld [vmem:[#allocation2] sm:$0xff]
    %v614 = vld [vmem:[#allocation2 + $0x8] sm:$0xff]
    %v615 = vld [vmem:[#allocation7] sm:$0xff]
    %v616 = vld [vmem:[#allocation7 + $0x8] sm:$0xff]
    %v617 = vld [vmem:[#allocation7 + $0x10] sm:$0xff]
    %v618 = vld [vmem:[#allocation7 + $0x18] sm:$0xff]
    %v619 = vld [vmem:[%s4] sm:$0x1]
    %v621 = vlaneseq
    %v622 = vshrl.u32 %v621, 7
    %v623 = vsub.s32 0, %v622
    %v624 = vrot.slane %v619, %v623
    %vm626 = vcmask 261120
    %v628 = vsel %vm626, %v613, 0
    %v631 = vsel %vm626, %v614, 0
    %v634 = vsel %vm626, %v615, 0
    %v637 = vsel %vm626, %v616, 0
    %v640 = vsel %vm626, %v617, 0
    %v643 = vsel %vm626, %v618, 0
    %645 = vmatprep.subr.mxu0 0.0
    %646 = vmatpush1.xpose.msra.mxu0 0.0
    %647 = vmatprep.subr.mxu0 0.0
    %648 = vmatpush1.xpose.msra.mxu0 0.0
    %649 = vmatprep.subr.mxu0 0.0
    %650 = vmatpush1.xpose.msra.mxu0 0.0
    %651 = vmatprep.subr.mxu0 0.0
    %652 = vmatpush1.xpose.msra.mxu0 0.0
    %653 = vmatprep.subr.mxu0 0.0
    %654 = vmatpush1.xpose.msra.mxu0 0.0
    %655 = vmatprep.subr.mxu0 0.0
    %656 = vmatpush1.xpose.msra.mxu0 0.0
    %657 = vmatprep.subr.mxu0 0.0
    %658 = vmatpush1.xpose.msra.mxu0 0.0
    %659 = vmatprep.subr.mxu0 0.0
    %660 = vmatpush1.xpose.msra.mxu0 0.0
    %661 = vmatprep.subr.mxu0 0.0
    %662 = vmatpush1.xpose.msra.mxu0 0.0
    %663 = vmatprep.subr.mxu0 0.0
    %664 = vmatpush1.xpose.msra.mxu0 0.0
    %665 = vmatprep.subr.mxu0 0.0
    %666 = vmatpush1.xpose.msra.mxu0 0.0
    %667 = vmatprep.subr.mxu0 0.0
    %668 = vmatpush1.xpose.msra.mxu0 0.0
    %669 = vmatprep.subr.mxu0 0.0
    %670 = vmatpush1.xpose.msra.mxu0 %v643
    %671 = vmatprep.subr.mxu0 0.0
    %672 = vmatpush1.xpose.msra.mxu0 %v640
    %673 = vmatprep.subr.mxu0 0.0
    %674 = vmatpush1.xpose.msra.mxu0 %v637
    %675 = vmatprep.subr.mxu0 0.0
    %676 = vmatpush1.xpose.msra.mxu0 %v634
    %677 = vmatprep.subr.mxu0 0.0
    %678 = vmatpush2.xpose.msra.mxu0 0.0
    %679 = vmatprep.subr.mxu0 0.0
    %680 = vmatpush2.xpose.msra.mxu0 0.0
    %681 = vmatprep.subr.mxu0 0.0
    %682 = vmatpush2.xpose.msra.mxu0 0.0
    %683 = vmatprep.subr.mxu0 0.0
    %684 = vmatpush2.xpose.msra.mxu0 0.0
    %685 = vmatprep.subr.mxu0 0.0
    %686 = vmatpush2.xpose.msra.mxu0 0.0
    %687 = vmatprep.subr.mxu0 0.0
    %688 = vmatpush2.xpose.msra.mxu0 0.0
    %689 = vmatprep.subr.mxu0 0.0
    %690 = vmatpush2.xpose.msra.mxu0 0.0
    %691 = vmatprep.subr.mxu0 0.0
    %692 = vmatpush2.xpose.msra.mxu0 0.0
    %693 = vmatprep.subr.mxu0 0.0
    %694 = vmatpush2.xpose.msra.mxu0 0.0
    %695 = vmatprep.subr.mxu0 0.0
    %696 = vmatpush2.xpose.msra.mxu0 0.0
    %697 = vmatprep.subr.mxu0 0.0
    %698 = vmatpush2.xpose.msra.mxu0 0.0
    %699 = vmatprep.subr.mxu0 0.0
    %700 = vmatpush2.xpose.msra.mxu0 0.0
    %701 = vmatprep.subr.mxu0 0.0
    %702 = vmatpush2.xpose.msra.mxu0 0.0
    %703 = vmatprep.subr.mxu0 0.0
    %704 = vmatpush2.xpose.msra.mxu0 0.0
    %705 = vmatprep.subr.mxu0 0.0
    %706 = vmatpush2.xpose.msra.mxu0 0.0
    %707 = vmatprep.subr.mxu0 0.0
    %708 = vmatpush2.xpose.msra.mxu0 0.0
    %709 = vmatprep.mubr.f32.mxu0 0.0
    %710 = vmatmul.mubr.f32.gmra.mxu0 %v628
    %v711 = vpop.f32.mrf.mxu0
    %v712 = vadd.f32 %v624, %v711
    %v713 = vpop.f32.mrf.mxu0
    %714 = vmatprep.mubr.f32.mxu0 0.0
    %715 = vmatmul.mubr.f32.gmra.mxu0 %v631
    %v716 = vpop.f32.mrf.mxu0
    %v717 = vadd.f32 %v624, %v716
    %v718 = vpop.f32.mrf.mxu0
    %719 = vdwg.mxu0
    %v720 = vmul.f32 %v712, 3.0
    %v721 = vmul.f32 %v717, 3.0
    %v722 = vtanh.pop %v720
    %v723 = vtanh.pop %v721
    %v724 = vld [vmem:[#allocation3] sm:$0xff]
    %v725 = vld [vmem:[#allocation3 + $0x8] sm:$0xff]
    %v726 = vld [vmem:[#allocation10] sm:$0xff]
    %v727 = vld [vmem:[#allocation10 + $0x8] sm:$0xff]
    %v728 = vld [vmem:[#allocation10 + $0x10] sm:$0xff]
    %v729 = vld [vmem:[#allocation10 + $0x18] sm:$0xff]
    %v730 = vld [vmem:[%s6] sm:$0x1]
    %v732 = vlaneseq
    %v733 = vshrl.u32 %v732, 7
    %v734 = vsub.s32 0, %v733
    %v735 = vrot.slane %v730, %v734
    %v738 = vsel %vm626, %v724, 0
    %v741 = vsel %vm626, %v725, 0
    %v744 = vsel %vm626, %v726, 0
    %v747 = vsel %vm626, %v727, 0
    %v750 = vsel %vm626, %v728, 0
    %v753 = vsel %vm626, %v729, 0
    %755 = vmatprep.subr.mxu0 0.0
    %756 = vmatpush1.xpose.msra.mxu0 0.0
    %757 = vmatprep.subr.mxu0 0.0
    %758 = vmatpush1.xpose.msra.mxu0 0.0
    %759 = vmatprep.subr.mxu0 0.0
    %760 = vmatpush1.xpose.msra.mxu0 0.0
    %761 = vmatprep.subr.mxu0 0.0
    %762 = vmatpush1.xpose.msra.mxu0 0.0
    %763 = vmatprep.subr.mxu0 0.0
    %764 = vmatpush1.xpose.msra.mxu0 0.0
    %765 = vmatprep.subr.mxu0 0.0
    %766 = vmatpush1.xpose.msra.mxu0 0.0
    %767 = vmatprep.subr.mxu0 0.0
    %768 = vmatpush1.xpose.msra.mxu0 0.0
    %769 = vmatprep.subr.mxu0 0.0
    %770 = vmatpush1.xpose.msra.mxu0 0.0
    %771 = vmatprep.subr.mxu0 0.0
    %772 = vmatpush1.xpose.msra.mxu0 0.0
    %773 = vmatprep.subr.mxu0 0.0
    %774 = vmatpush1.xpose.msra.mxu0 0.0
    %775 = vmatprep.subr.mxu0 0.0
    %776 = vmatpush1.xpose.msra.mxu0 0.0
    %777 = vmatprep.subr.mxu0 0.0
    %778 = vmatpush1.xpose.msra.mxu0 0.0
    %779 = vmatprep.subr.mxu0 0.0
    %780 = vmatpush1.xpose.msra.mxu0 %v753
    %781 = vmatprep.subr.mxu0 0.0
    %782 = vmatpush1.xpose.msra.mxu0 %v750
    %783 = vmatprep.subr.mxu0 0.0
    %784 = vmatpush1.xpose.msra.mxu0 %v747
    %785 = vmatprep.subr.mxu0 0.0
    %786 = vmatpush1.xpose.msra.mxu0 %v744
    %787 = vmatprep.subr.mxu0 0.0
    %788 = vmatpush2.xpose.msra.mxu0 0.0
    %789 = vmatprep.subr.mxu0 0.0
    %790 = vmatpush2.xpose.msra.mxu0 0.0
    %791 = vmatprep.subr.mxu0 0.0
    %792 = vmatpush2.xpose.msra.mxu0 0.0
    %793 = vmatprep.subr.mxu0 0.0
    %794 = vmatpush2.xpose.msra.mxu0 0.0
    %795 = vmatprep.subr.mxu0 0.0
    %796 = vmatpush2.xpose.msra.mxu0 0.0
    %797 = vmatprep.subr.mxu0 0.0
    %798 = vmatpush2.xpose.msra.mxu0 0.0
    %799 = vmatprep.subr.mxu0 0.0
    %800 = vmatpush2.xpose.msra.mxu0 0.0
    %801 = vmatprep.subr.mxu0 0.0
    %802 = vmatpush2.xpose.msra.mxu0 0.0
    %803 = vmatprep.subr.mxu0 0.0
    %804 = vmatpush2.xpose.msra.mxu0 0.0
    %805 = vmatprep.subr.mxu0 0.0
    %806 = vmatpush2.xpose.msra.mxu0 0.0
    %807 = vmatprep.subr.mxu0 0.0
    %808 = vmatpush2.xpose.msra.mxu0 0.0
    %809 = vmatprep.subr.mxu0 0.0
    %810 = vmatpush2.xpose.msra.mxu0 0.0
    %811 = vmatprep.subr.mxu0 0.0
    %812 = vmatpush2.xpose.msra.mxu0 0.0
    %813 = vmatprep.subr.mxu0 0.0
    %814 = vmatpush2.xpose.msra.mxu0 0.0
    %815 = vmatprep.subr.mxu0 0.0
    %816 = vmatpush2.xpose.msra.mxu0 0.0
    %817 = vmatprep.subr.mxu0 0.0
    %818 = vmatpush2.xpose.msra.mxu0 0.0
    %819 = vmatprep.mubr.f32.mxu0 0.0
    %820 = vmatmul.mubr.f32.gmra.mxu0 %v738
    %v821 = vpop.f32.mrf.mxu0
    %v822 = vadd.f32 %v735, %v821
    %v823 = vpop.f32.mrf.mxu0
    %824 = vmatprep.mubr.f32.mxu0 0.0
    %825 = vmatmul.mubr.f32.gmra.mxu0 %v741
    %v826 = vpop.f32.mrf.mxu0
    %v827 = vadd.f32 %v735, %v826
    %v828 = vpop.f32.mrf.mxu0
    %829 = vdwg.mxu0
    %v830 = vmul.f32 %v822, 3.0
    %v831 = vmul.f32 %v827, 3.0
    %v832 = vtanh.pop %v830
    %v833 = vtanh.pop %v831
    %v835 = vsel %vm626, %v722, 0
    %v838 = vsel %vm626, %v723, 0
    %v841 = vsel %vm626, %v832, 0
    %v844 = vsel %vm626, %v833, 0
    %846 = vmatprep.subr.mxu0 0.0
    %847 = vmatpush1.xpose.msra.mxu0 0.0
    %848 = vmatprep.subr.mxu0 0.0
    %849 = vmatpush1.xpose.msra.mxu0 0.0
    %850 = vmatprep.subr.mxu0 0.0
    %851 = vmatpush1.xpose.msra.mxu0 0.0
    %852 = vmatprep.subr.mxu0 0.0
    %853 = vmatpush1.xpose.msra.mxu0 0.0
    %854 = vmatprep.subr.mxu0 0.0
    %855 = vmatpush1.xpose.msra.mxu0 0.0
    %856 = vmatprep.subr.mxu0 0.0
    %857 = vmatpush1.xpose.msra.mxu0 0.0
    %858 = vmatprep.subr.mxu0 0.0
    %859 = vmatpush1.xpose.msra.mxu0 0.0
    %860 = vmatprep.subr.mxu0 0.0
    %861 = vmatpush1.xpose.msra.mxu0 0.0
    %862 = vmatprep.subr.mxu0 0.0
    %863 = vmatpush1.xpose.msra.mxu0 0.0
    %864 = vmatprep.subr.mxu0 0.0
    %865 = vmatpush1.xpose.msra.mxu0 0.0
    %866 = vmatprep.subr.mxu0 0.0
    %867 = vmatpush1.xpose.msra.mxu0 0.0
    %868 = vmatprep.subr.mxu0 0.0
    %869 = vmatpush1.xpose.msra.mxu0 0.0
    %870 = vmatprep.subr.mxu0 0.0
    %871 = vmatpush1.xpose.msra.mxu0 0.0
    %872 = vmatprep.subr.mxu0 0.0
    %873 = vmatpush1.xpose.msra.mxu0 0.0
    %874 = vmatprep.subr.mxu0 0.0
    %875 = vmatpush1.xpose.msra.mxu0 %v844
    %876 = vmatprep.subr.mxu0 0.0
    %877 = vmatpush1.xpose.msra.mxu0 %v841
    %878 = vmatprep.subr.mxu0 0.0
    %879 = vmatpush2.xpose.msra.mxu0 0.0
    %880 = vmatprep.subr.mxu0 0.0
    %881 = vmatpush2.xpose.msra.mxu0 0.0
    %882 = vmatprep.subr.mxu0 0.0
    %883 = vmatpush2.xpose.msra.mxu0 0.0
    %884 = vmatprep.subr.mxu0 0.0
    %885 = vmatpush2.xpose.msra.mxu0 0.0
    %886 = vmatprep.subr.mxu0 0.0
    %887 = vmatpush2.xpose.msra.mxu0 0.0
    %888 = vmatprep.subr.mxu0 0.0
    %889 = vmatpush2.xpose.msra.mxu0 0.0
    %890 = vmatprep.subr.mxu0 0.0
    %891 = vmatpush2.xpose.msra.mxu0 0.0
    %892 = vmatprep.subr.mxu0 0.0
    %893 = vmatpush2.xpose.msra.mxu0 0.0
    %894 = vmatprep.subr.mxu0 0.0
    %895 = vmatpush2.xpose.msra.mxu0 0.0
    %896 = vmatprep.subr.mxu0 0.0
    %897 = vmatpush2.xpose.msra.mxu0 0.0
    %898 = vmatprep.subr.mxu0 0.0
    %899 = vmatpush2.xpose.msra.mxu0 0.0
    %900 = vmatprep.subr.mxu0 0.0
    %901 = vmatpush2.xpose.msra.mxu0 0.0
    %902 = vmatprep.subr.mxu0 0.0
    %903 = vmatpush2.xpose.msra.mxu0 0.0
    %904 = vmatprep.subr.mxu0 0.0
    %905 = vmatpush2.xpose.msra.mxu0 0.0
    %906 = vmatprep.subr.mxu0 0.0
    %907 = vmatpush2.xpose.msra.mxu0 0.0
    %908 = vmatprep.subr.mxu0 0.0
    %909 = vmatpush2.xpose.msra.mxu0 0.0
    %910 = vmatprep.mubr.f32.mxu0 0.0
    %911 = vmatmul.mubr.f32.gmra.mxu0 %v835
    %v912 = vpop.f32.mrf.mxu0
    %v913 = vadd.f32 0.0, %v912
    %v914 = vpop.f32.mrf.mxu0
    %915 = vmatprep.mubr.f32.mxu0 0.0
    %916 = vmatmul.mubr.f32.gmra.mxu0 %v838
    %v917 = vpop.f32.mrf.mxu0
    %v918 = vadd.f32 0.0, %v917
    %v919 = vpop.f32.mrf.mxu0
    %920 = vdwg.mxu0
    %921 = vxpose.xlu0.b32.start [1/16] %v913, 128
    %922 = vxpose.xlu0.b32.cont [2/16] %v918, 128
    %923 = vxpose.xlu0.b32.cont [3/16] 0.0, 128
    %924 = vxpose.xlu0.b32.cont [4/16] 0.0, 128
    %925 = vxpose.xlu0.b32.cont [5/16] 0.0, 128
    %926 = vxpose.xlu0.b32.cont [6/16] 0.0, 128
    %927 = vxpose.xlu0.b32.cont [7/16] 0.0, 128
    %928 = vxpose.xlu0.b32.cont [8/16] 0.0, 128
    %929 = vxpose.xlu0.b32.cont [9/16] 0.0, 128
    %930 = vxpose.xlu0.b32.cont [10/16] 0.0, 128
    %931 = vxpose.xlu0.b32.cont [11/16] 0.0, 128
    %932 = vxpose.xlu0.b32.cont [12/16] 0.0, 128
    %933 = vxpose.xlu0.b32.cont [13/16] 0.0, 128
    %934 = vxpose.xlu0.b32.cont [14/16] 0.0, 128
    %935 = vxpose.xlu0.b32.cont [15/16] 0.0, 128
    %936 = vxpose.xlu0.b32.end [16/16] 0.0, 128
    %v937 = vpop.trf.xlu0
    %v938 = vpop.trf.xlu0
    %v939 = vpop.trf.xlu0
    %v940 = vpop.trf.xlu0
    %v941 = vpop.trf.xlu0
    %v942 = vpop.trf.xlu0
    %v943 = vpop.trf.xlu0
    %v944 = vpop.trf.xlu0
    %v945 = vpop.trf.xlu0
    %v946 = vpop.trf.xlu0
    %v947 = vpop.trf.xlu0
    %v948 = vpop.trf.xlu0
    %v949 = vpop.trf.xlu0
    %v950 = vpop.trf.xlu0
    %v951 = vpop.trf.xlu0
    %v952 = vpop.trf.xlu0
    %v953 = vsub.f32 %v913, %v937
    %v954 = vsub.f32 %v918, %v938
    %v955 = vmul.f32 %v953, 3.0
    %v956 = vmul.f32 %v954, 3.0
    %v957 = vtanh.pop %v955
    %v958 = vtanh.pop %v956
    %v959 = vmax.f32 %v957, 0.0
    %v960 = vmax.f32 %v958, 0.0
    %v961 = vld [vmem:[#allocation12] sm:$0xff]
    %v962 = vld [vmem:[#allocation12 + $0x8] sm:$0xff]
    %v963 = vmul.f32 %v961, 0.01
    %v964 = vmul.f32 %v962, 0.01
    %v965 = vadd.f32 %v959, %v963
    %v966 = vadd.f32 %v960, %v964
    %vm967 = vcmask 130048
    %v968 = vsel %vm967, %v965, -inf
    %969 = vmax.xlane.f32.xlu0 %v968
    %v970 = vpop.xlane.xlu0 %969
    %v971 = vsel %vm967, %v966, -inf
    %972 = vmax.xlane.f32.xlu0 %v971
    %v973 = vpop.xlane.xlu0 %972
    %vm974 = vcmp.ge.f32.partialorder %v965, %v970
    %vm975 = vcmp.ge.f32.partialorder %v966, %v973
    %v976 = vsel %vm974, -inf, %v965
    %v977 = vsel %vm975, -inf, %v966
    %v978 = vsel %vm967, %v976, -inf
    %979 = vmax.xlane.f32.xlu0 %v978
    %v980 = vpop.xlane.xlu0 %979
    %v981 = vsel %vm967, %v977, -inf
    %982 = vmax.xlane.f32.xlu0 %v981
    %v983 = vpop.xlane.xlu0 %982
    %vm984 = vcmp.ge.f32.partialorder %v976, %v980
    %vm985 = vcmp.ge.f32.partialorder %v977, %v983
    %v986 = vsel %vm984, -inf, %v976
    %v987 = vsel %vm985, -inf, %v977
    %v988 = vsel %vm967, %v986, -inf
    %989 = vmax.xlane.f32.xlu0 %v988
    %v990 = vpop.xlane.xlu0 %989
    %v991 = vsel %vm967, %v987, -inf
    %992 = vmax.xlane.f32.xlu0 %v991
    %v993 = vpop.xlane.xlu0 %992
    %vm994 = vcmp.ge.f32.partialorder %v986, %v990
    %vm995 = vcmp.ge.f32.partialorder %v987, %v993
    %v996 = vsel %vm994, -inf, %v986
    %v997 = vsel %vm995, -inf, %v987
    %v998 = vsel %vm967, %v996, -inf
    %999 = vmax.xlane.f32.xlu0 %v998
    %v1000 = vpop.xlane.xlu0 %999
    %v1001 = vsel %vm967, %v997, -inf
    %1002 = vmax.xlane.f32.xlu0 %v1001
    %v1003 = vpop.xlane.xlu0 %1002
    %vm1004 = vcmp.ge.f32.partialorder %v965, %v1000
    %vm1005 = vcmp.ge.f32.partialorder %v966, %v1003
    %v1006 = vsel %vm1004, 1, 0
    %v1007 = vsel %vm1005, 1, 0
    %v1008 = vcvt.s32.f32 %v1006
    %v1009 = vcvt.s32.f32 %v1007
    %v1010 = vmul.f32 %v959, %v1008
    %v1011 = vmul.f32 %v960, %v1009
    %1012 = vst.msk [vmem:[#allocation13] sm:$0xff] %vm967, %v1010
    %1013 = vst.msk [vmem:[#allocation13 + $0x8] sm:$0xff] %vm967, %v1011
    // Predicated region
    $region162: #{tpu_custom_call.1} parent=1 // pred_check
      _
    $region163: #{tpu_custom_call.1} parent=1 // pred_check_branch
      %1015 = sbr.rel (0) target = $region165
    $region164: #{tpu_custom_call.1} parent=1 // pred_region
      %s1017 = ssub.s32 256, 256
      %1018 = vsyncadd [#allocation9], %s1017
      %s1019 = sshll.u32 [#allocation13], 4
      %s1020 = int_to_ptr.vmem [resolvable:$true] %s1019
      %1025 = dma.vmem_to_hbm [thread:$0]  %s1020, 256, %s8, [#allocation9], 128, 128, 8
    $region165: #{tpu_custom_call.1} parent=1 // pred_fallthru
      _
    // Predicated region
    $region166: #{tpu_custom_call.1} parent=1 // pred_check
      _
    $region167: #{tpu_custom_call.1} parent=1 // pred_check_branch
      %1027 = sbr.rel (0) target = $region169
    $region168: #{tpu_custom_call.1} parent=1 // pred_region
      %1028 = dma.done [#allocation9], 256
    $region169: #{tpu_custom_call.1} parent=1 // pred_fallthru
      _
    %1029 = vsyncpa [#allocation8], 1
    %1030 = vsyncpa [#allocation11], 1
    %1031 = vsyncpa [#allocation9], 1
  %1032 = vsyncmov [#allocation4]
  %s1033 = vpop.sfrf %1032
  %p1034 = scmp.eq.s32.totalorder %s1033, 0
  %p1035 = pneg %p1034
  %1037 = shalt.err (%p1035)
  %s1038 = scalar_lea.sflag [#allocation4], 1
  %1039 = vsyncmov %s1038
  %s1040 = vpop.sfrf %1039
  %p1041 = scmp.eq.s32.totalorder %s1040, 0
  %p1042 = pneg %p1041
  %1044 = shalt.err (%p1042)

</llo_original>
